<compile_context>
chip_gen: v6e
topology: v6e:2x2x1
jax: 0.10.0
libtpu: 0.0.40
codegen_flags: <defaults>
</compile_context>

<pallas_src>
import functools

import jax
import jax.numpy as jnp
from jax import lax
from jax.experimental import pallas as pl
from jax.experimental.pallas import tpu as pltpu

H_PAD = 128     # hidden 75  -> 128 lanes
F1_PAD = 128    # fc1 out 10 -> 128 lanes
OUT_PAD = 128   # logits 2   -> 128 lanes (lane-dense output store)
B_PAD = 8       # batch      -> one full sublane tile


def _sigmoid_via_tanh(x):
    # sigmoid(x) = 0.5 * tanh(0.5 * x) + 0.5  -> single EUP push (vs exp+recip).
    return 0.5 * jnp.tanh(0.5 * x) + 0.5


def lstm_mlp_kernel(ids_ref, emb_ref, wx_ref, wh_ref, b_ref, w1_ref, b1_ref,
                    w2_ref, b2_ref, out_ref, xbuf_ref, xproj_ref, *, S, B):
    # ids_ref  : (S*B,)        int32 token ids in SMEM (time-major, t*B + b)
    # emb_ref  : (vocab, 1, E) f32 embedding table (leading-dim gather)
    # wx_ref   : (E, 4*Hp)     bf16 fused input->gate weights, gate order (i,f,g,o)
    # wh_ref   : (Hp, 4*Hp)    bf16 fused hidden->gate weights
    # b_ref    : (1, 4*Hp)     f32 combined gate biases (b_ih + b_hh), 0 in pad lanes
    # w1_ref   : (Hp, F1p)     bf16 fc1 weight (padded rows/cols are zero)
    # b1_ref   : (1, F1p)      f32
    # w2_ref   : (F1p, Op)     bf16 fc2 weight (padded rows/cols are zero)
    # b2_ref   : (1, Op)       f32
    # out_ref  : (Bp, Op)      f32 logits (only [:B, :2] meaningful)
    # xbuf_ref : (S*Bp, E)     f32 VMEM scratch: gathered embeddings
    # xproj_ref: (S*Bp, 4*Hp)  f32 VMEM scratch: hoisted input projection
    Bp = out_ref.shape[0]
    Hp = wh_ref.shape[0]

    # ---- Embedding gather, fused into the kernel (ids are SMEM scalars). ----
    xbuf_ref[...] = jnp.zeros(xbuf_ref.shape, xbuf_ref.dtype)  # keep pad rows clean
    for t in range(S):
        for b in range(B):
            tok = ids_ref[t * B + b]
            # Dynamic index on the leading (non-layout) dim -> (1, E) row.
            xbuf_ref[pl.ds(t * Bp + b, 1), :] = emb_ref[tok]

    # ---- Hoisted input projection: one fused matmul for all timesteps & all
    #      gates, with the gate biases folded in (off the serial path). ----
    xproj_ref[...] = (
        jnp.dot(xbuf_ref[...].astype(jnp.bfloat16), wx_ref[...],
                preferred_element_type=jnp.float32)
        + b_ref[...])

    h = jnp.zeros((Bp, Hp), jnp.float32)
    c = jnp.zeros((Bp, Hp), jnp.float32)

    # S is small and static -> full static unroll of the recurrence.
    for t in range(S):
        # NOTE: wh_ref[...] is re-read each step (NOT hoisted) so the 128 KiB
        # (32-vreg) weight value is never live across the whole unroll.
        gates = (jnp.dot(h.astype(jnp.bfloat16), wh_ref[...],
                         preferred_element_type=jnp.float32)
                 + xproj_ref[t * Bp:(t + 1) * Bp, :])       # (Bp, 4Hp) f32
        i_g = _sigmoid_via_tanh(gates[:, 0 * Hp:1 * Hp])
        f_g = _sigmoid_via_tanh(gates[:, 1 * Hp:2 * Hp])
        g_g = jnp.tanh(gates[:, 2 * Hp:3 * Hp])
        o_g = _sigmoid_via_tanh(gates[:, 3 * Hp:4 * Hp])
        c = f_g * c + i_g * g_g
        h = o_g * jnp.tanh(c)
        # Padded lanes (75..127): gate pre-activations are 0 there, so
        # i=f=o=0.5, g=0, hence c stays 0 and h stays 0 -> padding never
        # contaminates the real outputs.

    # TODO(synk): nn.Dropout(0.2) is identity at inference time; no mask applied.
    hid = jnp.tanh(jnp.dot(h.astype(jnp.bfloat16), w1_ref[...],
                           preferred_element_type=jnp.float32) + b1_ref[...])
    out_ref[...] = (jnp.dot(hid.astype(jnp.bfloat16), w2_ref[...],
                            preferred_element_type=jnp.float32) + b2_ref[...])


def pack_params(params):
    """One-time packing: fuse per-gate LSTM weights along lanes, pad to vreg tiles."""
    wx, wh, b = params["wx"], params["wh"], params["b"]
    H = wx.shape[2]

    def pad_lane(a, n):
        return jnp.pad(a, [(0, 0)] * (a.ndim - 1) + [(0, n - a.shape[-1])])

    # (4, in, H) -> (in, 4*H_PAD): gate-major along lanes, each gate padded to 128.
    wx_f = jnp.concatenate([pad_lane(wx[g], H_PAD) for g in range(4)], axis=-1)
    wh_p = jnp.pad(wh, ((0, 0), (0, H_PAD - H), (0, 0)))          # pad rows too
    wh_f = jnp.concatenate([pad_lane(wh_p[g], H_PAD) for g in range(4)], axis=-1)
    b_f = jnp.concatenate([pad_lane(b[g], H_PAD) for g in range(4)], axis=-1)

    w1 = jnp.pad(params["w1"], ((0, H_PAD - H),
                                (0, F1_PAD - params["w1"].shape[1])))
    b1 = pad_lane(params["b1"], F1_PAD)
    w2 = jnp.pad(params["w2"], ((0, F1_PAD - params["w2"].shape[0]),
                                (0, OUT_PAD - params["w2"].shape[1])))
    b2 = pad_lane(params["b2"], OUT_PAD)

    emb = params["embedding"].astype(jnp.float32)
    vocab, E = emb.shape
    return {
        "emb": emb.reshape(vocab, 1, E),          # leading-dim gather in kernel
        "wx": wx_f.astype(jnp.bfloat16),
        "wh": wh_f.astype(jnp.bfloat16),
        "b": b_f.astype(jnp.float32),
        "w1": w1.astype(jnp.bfloat16),
        "b1": b1.astype(jnp.float32),
        "w2": w2.astype(jnp.bfloat16),
        "b2": b2.astype(jnp.float32),
    }


@functools.partial(jax.jit, static_argnames=("out_dim",))
def rnn_forward(text, packed, *, out_dim=2):
    """text: (S, B) int32 token ids, time-major. Returns (B, out_dim) f32 logits."""
    S, B = text.shape
    assert B <= B_PAD, f"batch {B} > {B_PAD}; add a batch grid axis"
    E = packed["emb"].shape[-1]

    ids = text.reshape(-1).astype(jnp.int32)      # (S*B,) time-major flatten

    kern = functools.partial(lstm_mlp_kernel, S=S, B=B)
    vmem = pl.BlockSpec(memory_space=pltpu.MemorySpace.VMEM)
    smem = pl.BlockSpec(memory_space=pltpu.MemorySpace.SMEM)

    out = pl.pallas_call(
        kern,
        out_shape=jax.ShapeDtypeStruct((B_PAD, OUT_PAD), jnp.float32),
        in_specs=[smem] + [vmem] * 8,
        out_specs=vmem,
        scratch_shapes=[
            pltpu.VMEM((S * B_PAD, E), jnp.float32),          # gathered x
            pltpu.VMEM((S * B_PAD, 4 * H_PAD), jnp.float32),  # input projection
        ],
    )(ids, packed["emb"], packed["wx"], packed["wh"], packed["b"],
      packed["w1"], packed["b1"], packed["w2"], packed["b2"])
    return out[:B, :out_dim]


def init_params(key, vocab_size=100, embedding_dim=32, hidden_dim=75,
                output_size=2):
    ks = jax.random.split(key, 10)
    k_std = 1.0 / jnp.sqrt(hidden_dim)

    def unif(k, shape, bound):
        return jax.random.uniform(k, shape, jnp.float32, -bound, bound)

    params = {
        # nn.Embedding default init ~ N(0, 1)
        "embedding": jax.random.normal(ks[0], (vocab_size, embedding_dim),
                                       jnp.float32),
        # LSTM weights, stored transposed (in, out), stacked per gate (i,f,g,o)
        "wx": unif(ks[1], (4, embedding_dim, hidden_dim), k_std),
        "wh": unif(ks[2], (4, hidden_dim, hidden_dim), k_std),
        # combined bias b_ih + b_hh
        "b": unif(ks[3], (4, 1, hidden_dim), k_std)
             + unif(ks[4], (4, 1, hidden_dim), k_std),
        "w1": unif(ks[5], (hidden_dim, 10), 1.0 / jnp.sqrt(hidden_dim)),
        "b1": unif(ks[6], (1, 10), 1.0 / jnp.sqrt(hidden_dim)),
        "w2": unif(ks[7], (10, output_size), 1.0 / jnp.sqrt(10.0)),
        "b2": unif(ks[8], (1, output_size), 1.0 / jnp.sqrt(10.0)),
    }
    return params


def rnn_forward_ref(text, params):
    """Pure-JAX f32 reference (same math), for a correctness cross-check."""
    x = jnp.take(params["embedding"], text, axis=0).astype(jnp.float32)
    S, B, E = x.shape
    H = params["wh"].shape[-1]
    wx, wh, b = params["wx"], params["wh"], params["b"]

    def step(carry, xt):
        h, c = carry
        i_g = jax.nn.sigmoid(xt @ wx[0] + h @ wh[0] + b[0])
        f_g = jax.nn.sigmoid(xt @ wx[1] + h @ wh[1] + b[1])
        g_g = jnp.tanh(xt @ wx[2] + h @ wh[2] + b[2])
        o_g = jax.nn.sigmoid(xt @ wx[3] + h @ wh[3] + b[3])
        c_new = f_g * c + i_g * g_g
        h_new = o_g * jnp.tanh(c_new)
        return (h_new, c_new), None

    (h_last, _), _ = lax.scan(step, (jnp.zeros((B, H)), jnp.zeros((B, H))), x)
    hid = jnp.tanh(h_last @ params["w1"] + params["b1"])
    return hid @ params["w2"] + params["b2"]


if __name__ == "__main__":
    key = jax.random.PRNGKey(0)
    k_param, k_text = jax.random.split(key)

    vocab_size, seq_len, batch = 100, 8, 2
    params = init_params(k_param, vocab_size=vocab_size)
    packed = pack_params(params)                  # one-time, outside the hot path

    text = jax.random.randint(k_text, (seq_len, batch), 0, vocab_size,
                              dtype=jnp.int32)    # (S, B) time-major

    out = jax.block_until_ready(rnn_forward(text, packed, out_dim=2))
    ref = jax.block_until_ready(rnn_forward_ref(text, params))

    assert out.shape == (batch, 2), out.shape
    # bf16 matmul operands (f32 accumulation) -> slightly looser tolerance.
    assert jnp.allclose(out, ref, rtol=2e-2, atol=2e-2), (out, ref)

    print("KERNEL_OK")
</pallas_src>

<mosaic_0001>
module attributes {stable_mosaic.version = 11 : i64} {
  func.func @lstm_mlp_kernel(%arg0: memref<16xi32, #tpu.memory_space<smem>>, %arg1: memref<100x1x32xf32, #tpu.memory_space<vmem>>, %arg2: memref<32x512xbf16, #tpu.memory_space<vmem>>, %arg3: memref<128x512xbf16, #tpu.memory_space<vmem>>, %arg4: memref<1x512xf32, #tpu.memory_space<vmem>>, %arg5: memref<128x128xbf16, #tpu.memory_space<vmem>>, %arg6: memref<1x128xf32, #tpu.memory_space<vmem>>, %arg7: memref<128x128xbf16, #tpu.memory_space<vmem>>, %arg8: memref<1x128xf32, #tpu.memory_space<vmem>>, %arg9: memref<8x128xf32, #tpu.memory_space<vmem>>, %arg10: memref<64x32xf32, #tpu.memory_space<vmem>>, %arg11: memref<64x512xf32, #tpu.memory_space<vmem>>) attributes {dimension_semantics = [], scalar_prefetch = 0 : i64, scratch_operands = 2 : i64, tpu.core_type = #tpu.core_type<tc>} {
    %cst = arith.constant 0.000000e+00 : f32
    %0 = vector.broadcast %cst : f32 to vector<64x32xf32>
    %c0 = arith.constant 0 : index
    %c0_0 = arith.constant 0 : index
    %1 = vector.load %arg10[%c0, %c0_0] : memref<64x32xf32, #tpu.memory_space<vmem>>, vector<64x32xf32>
    tpu.vector_store %arg10[%c0, %c0_0], %0 {strides = array<i32>} : memref<64x32xf32, #tpu.memory_space<vmem>>, vector<64x32xf32>,
    %c0_1 = arith.constant 0 : index
    %2 = memref.load %arg0[%c0_1] : memref<16xi32, #tpu.memory_space<smem>>
    %3 = arith.index_cast %2 : i32 to index
    %c0_2 = arith.constant 0 : index
    %c0_3 = arith.constant 0 : index
    %4 = vector.load %arg1[%3, %c0_2, %c0_3] : memref<100x1x32xf32, #tpu.memory_space<vmem>>, vector<1x1x32xf32>
    %5 = vector.shape_cast %4 : vector<1x1x32xf32> to vector<1x32xf32>
    %c0_4 = arith.constant 0 : index
    %c0_5 = arith.constant 0 : index
    %6 = vector.load %arg10[%c0_4, %c0_5] : memref<64x32xf32, #tpu.memory_space<vmem>>, vector<1x32xf32>
    tpu.vector_store %arg10[%c0_4, %c0_5], %5 {strides = array<i32>} : memref<64x32xf32, #tpu.memory_space<vmem>>, vector<1x32xf32>,
    %c1 = arith.constant 1 : index
    %7 = memref.load %arg0[%c1] : memref<16xi32, #tpu.memory_space<smem>>
    %8 = arith.index_cast %7 : i32 to index
    %c0_6 = arith.constant 0 : index
    %c0_7 = arith.constant 0 : index
    %9 = vector.load %arg1[%8, %c0_6, %c0_7] : memref<100x1x32xf32, #tpu.memory_space<vmem>>, vector<1x1x32xf32>
    %10 = vector.shape_cast %9 : vector<1x1x32xf32> to vector<1x32xf32>
    %c1_8 = arith.constant 1 : index
    %c0_9 = arith.constant 0 : index
    %11 = vector.load %arg10[%c1_8, %c0_9] : memref<64x32xf32, #tpu.memory_space<vmem>>, vector<1x32xf32>
    tpu.vector_store %arg10[%c1_8, %c0_9], %10 {strides = array<i32>} : memref<64x32xf32, #tpu.memory_space<vmem>>, vector<1x32xf32>,
    %c2 = arith.constant 2 : index
    %12 = memref.load %arg0[%c2] : memref<16xi32, #tpu.memory_space<smem>>
    %13 = arith.index_cast %12 : i32 to index
    %c0_10 = arith.constant 0 : index
    %c0_11 = arith.constant 0 : index
    %14 = vector.load %arg1[%13, %c0_10, %c0_11] : memref<100x1x32xf32, #tpu.memory_space<vmem>>, vector<1x1x32xf32>
    %15 = vector.shape_cast %14 : vector<1x1x32xf32> to vector<1x32xf32>
    %c8 = arith.constant 8 : index
    %c0_12 = arith.constant 0 : index
    %16 = vector.load %arg10[%c8, %c0_12] : memref<64x32xf32, #tpu.memory_space<vmem>>, vector<1x32xf32>
    tpu.vector_store %arg10[%c8, %c0_12], %15 {strides = array<i32>} : memref<64x32xf32, #tpu.memory_space<vmem>>, vector<1x32xf32>,
    %c3 = arith.constant 3 : index
    %17 = memref.load %arg0[%c3] : memref<16xi32, #tpu.memory_space<smem>>
    %18 = arith.index_cast %17 : i32 to index
    %c0_13 = arith.constant 0 : index
    %c0_14 = arith.constant 0 : index
    %19 = vector.load %arg1[%18, %c0_13, %c0_14] : memref<100x1x32xf32, #tpu.memory_space<vmem>>, vector<1x1x32xf32>
    %20 = vector.shape_cast %19 : vector<1x1x32xf32> to vector<1x32xf32>
    %c9 = arith.constant 9 : index
    %c0_15 = arith.constant 0 : index
    %21 = vector.load %arg10[%c9, %c0_15] : memref<64x32xf32, #tpu.memory_space<vmem>>, vector<1x32xf32>
    tpu.vector_store %arg10[%c9, %c0_15], %20 {strides = array<i32>} : memref<64x32xf32, #tpu.memory_space<vmem>>, vector<1x32xf32>,
    %c4 = arith.constant 4 : index
    %22 = memref.load %arg0[%c4] : memref<16xi32, #tpu.memory_space<smem>>
    %23 = arith.index_cast %22 : i32 to index
    %c0_16 = arith.constant 0 : index
    %c0_17 = arith.constant 0 : index
    %24 = vector.load %arg1[%23, %c0_16, %c0_17] : memref<100x1x32xf32, #tpu.memory_space<vmem>>, vector<1x1x32xf32>
    %25 = vector.shape_cast %24 : vector<1x1x32xf32> to vector<1x32xf32>
    %c16 = arith.constant 16 : index
    %c0_18 = arith.constant 0 : index
    %26 = vector.load %arg10[%c16, %c0_18] : memref<64x32xf32, #tpu.memory_space<vmem>>, vector<1x32xf32>
    tpu.vector_store %arg10[%c16, %c0_18], %25 {strides = array<i32>} : memref<64x32xf32, #tpu.memory_space<vmem>>, vector<1x32xf32>,
    %c5 = arith.constant 5 : index
    %27 = memref.load %arg0[%c5] : memref<16xi32, #tpu.memory_space<smem>>
    %28 = arith.index_cast %27 : i32 to index
    %c0_19 = arith.constant 0 : index
    %c0_20 = arith.constant 0 : index
    %29 = vector.load %arg1[%28, %c0_19, %c0_20] : memref<100x1x32xf32, #tpu.memory_space<vmem>>, vector<1x1x32xf32>
    %30 = vector.shape_cast %29 : vector<1x1x32xf32> to vector<1x32xf32>
    %c17 = arith.constant 17 : index
    %c0_21 = arith.constant 0 : index
    %31 = vector.load %arg10[%c17, %c0_21] : memref<64x32xf32, #tpu.memory_space<vmem>>, vector<1x32xf32>
    tpu.vector_store %arg10[%c17, %c0_21], %30 {strides = array<i32>} : memref<64x32xf32, #tpu.memory_space<vmem>>, vector<1x32xf32>,
    %c6 = arith.constant 6 : index
    %32 = memref.load %arg0[%c6] : memref<16xi32, #tpu.memory_space<smem>>
    %33 = arith.index_cast %32 : i32 to index
    %c0_22 = arith.constant 0 : index
    %c0_23 = arith.constant 0 : index
    %34 = vector.load %arg1[%33, %c0_22, %c0_23] : memref<100x1x32xf32, #tpu.memory_space<vmem>>, vector<1x1x32xf32>
    %35 = vector.shape_cast %34 : vector<1x1x32xf32> to vector<1x32xf32>
    %c24 = arith.constant 24 : index
    %c0_24 = arith.constant 0 : index
    %36 = vector.load %arg10[%c24, %c0_24] : memref<64x32xf32, #tpu.memory_space<vmem>>, vector<1x32xf32>
    tpu.vector_store %arg10[%c24, %c0_24], %35 {strides = array<i32>} : memref<64x32xf32, #tpu.memory_space<vmem>>, vector<1x32xf32>,
    %c7 = arith.constant 7 : index
    %37 = memref.load %arg0[%c7] : memref<16xi32, #tpu.memory_space<smem>>
    %38 = arith.index_cast %37 : i32 to index
    %c0_25 = arith.constant 0 : index
    %c0_26 = arith.constant 0 : index
    %39 = vector.load %arg1[%38, %c0_25, %c0_26] : memref<100x1x32xf32, #tpu.memory_space<vmem>>, vector<1x1x32xf32>
    %40 = vector.shape_cast %39 : vector<1x1x32xf32> to vector<1x32xf32>
    %c25 = arith.constant 25 : index
    %c0_27 = arith.constant 0 : index
    %41 = vector.load %arg10[%c25, %c0_27] : memref<64x32xf32, #tpu.memory_space<vmem>>, vector<1x32xf32>
    tpu.vector_store %arg10[%c25, %c0_27], %40 {strides = array<i32>} : memref<64x32xf32, #tpu.memory_space<vmem>>, vector<1x32xf32>,
    %c8_28 = arith.constant 8 : index
    %42 = memref.load %arg0[%c8_28] : memref<16xi32, #tpu.memory_space<smem>>
    %43 = arith.index_cast %42 : i32 to index
    %c0_29 = arith.constant 0 : index
    %c0_30 = arith.constant 0 : index
    %44 = vector.load %arg1[%43, %c0_29, %c0_30] : memref<100x1x32xf32, #tpu.memory_space<vmem>>, vector<1x1x32xf32>
    %45 = vector.shape_cast %44 : vector<1x1x32xf32> to vector<1x32xf32>
    %c32 = arith.constant 32 : index
    %c0_31 = arith.constant 0 : index
    %46 = vector.load %arg10[%c32, %c0_31] : memref<64x32xf32, #tpu.memory_space<vmem>>, vector<1x32xf32>
    tpu.vector_store %arg10[%c32, %c0_31], %45 {strides = array<i32>} : memref<64x32xf32, #tpu.memory_space<vmem>>, vector<1x32xf32>,
    %c9_32 = arith.constant 9 : index
    %47 = memref.load %arg0[%c9_32] : memref<16xi32, #tpu.memory_space<smem>>
    %48 = arith.index_cast %47 : i32 to index
    %c0_33 = arith.constant 0 : index
    %c0_34 = arith.constant 0 : index
    %49 = vector.load %arg1[%48, %c0_33, %c0_34] : memref<100x1x32xf32, #tpu.memory_space<vmem>>, vector<1x1x32xf32>
    %50 = vector.shape_cast %49 : vector<1x1x32xf32> to vector<1x32xf32>
    %c33 = arith.constant 33 : index
    %c0_35 = arith.constant 0 : index
    %51 = vector.load %arg10[%c33, %c0_35] : memref<64x32xf32, #tpu.memory_space<vmem>>, vector<1x32xf32>
    tpu.vector_store %arg10[%c33, %c0_35], %50 {strides = array<i32>} : memref<64x32xf32, #tpu.memory_space<vmem>>, vector<1x32xf32>,
    %c10 = arith.constant 10 : index
    %52 = memref.load %arg0[%c10] : memref<16xi32, #tpu.memory_space<smem>>
    %53 = arith.index_cast %52 : i32 to index
    %c0_36 = arith.constant 0 : index
    %c0_37 = arith.constant 0 : index
    %54 = vector.load %arg1[%53, %c0_36, %c0_37] : memref<100x1x32xf32, #tpu.memory_space<vmem>>, vector<1x1x32xf32>
    %55 = vector.shape_cast %54 : vector<1x1x32xf32> to vector<1x32xf32>
    %c40 = arith.constant 40 : index
    %c0_38 = arith.constant 0 : index
    %56 = vector.load %arg10[%c40, %c0_38] : memref<64x32xf32, #tpu.memory_space<vmem>>, vector<1x32xf32>
    tpu.vector_store %arg10[%c40, %c0_38], %55 {strides = array<i32>} : memref<64x32xf32, #tpu.memory_space<vmem>>, vector<1x32xf32>,
    %c11 = arith.constant 11 : index
    %57 = memref.load %arg0[%c11] : memref<16xi32, #tpu.memory_space<smem>>
    %58 = arith.index_cast %57 : i32 to index
    %c0_39 = arith.constant 0 : index
    %c0_40 = arith.constant 0 : index
    %59 = vector.load %arg1[%58, %c0_39, %c0_40] : memref<100x1x32xf32, #tpu.memory_space<vmem>>, vector<1x1x32xf32>
    %60 = vector.shape_cast %59 : vector<1x1x32xf32> to vector<1x32xf32>
    %c41 = arith.constant 41 : index
    %c0_41 = arith.constant 0 : index
    %61 = vector.load %arg10[%c41, %c0_41] : memref<64x32xf32, #tpu.memory_space<vmem>>, vector<1x32xf32>
    tpu.vector_store %arg10[%c41, %c0_41], %60 {strides = array<i32>} : memref<64x32xf32, #tpu.memory_space<vmem>>, vector<1x32xf32>,
    %c12 = arith.constant 12 : index
    %62 = memref.load %arg0[%c12] : memref<16xi32, #tpu.memory_space<smem>>
    %63 = arith.index_cast %62 : i32 to index
    %c0_42 = arith.constant 0 : index
    %c0_43 = arith.constant 0 : index
    %64 = vector.load %arg1[%63, %c0_42, %c0_43] : memref<100x1x32xf32, #tpu.memory_space<vmem>>, vector<1x1x32xf32>
    %65 = vector.shape_cast %64 : vector<1x1x32xf32> to vector<1x32xf32>
    %c48 = arith.constant 48 : index
    %c0_44 = arith.constant 0 : index
    %66 = vector.load %arg10[%c48, %c0_44] : memref<64x32xf32, #tpu.memory_space<vmem>>, vector<1x32xf32>
    tpu.vector_store %arg10[%c48, %c0_44], %65 {strides = array<i32>} : memref<64x32xf32, #tpu.memory_space<vmem>>, vector<1x32xf32>,
    %c13 = arith.constant 13 : index
    %67 = memref.load %arg0[%c13] : memref<16xi32, #tpu.memory_space<smem>>
    %68 = arith.index_cast %67 : i32 to index
    %c0_45 = arith.constant 0 : index
    %c0_46 = arith.constant 0 : index
    %69 = vector.load %arg1[%68, %c0_45, %c0_46] : memref<100x1x32xf32, #tpu.memory_space<vmem>>, vector<1x1x32xf32>
    %70 = vector.shape_cast %69 : vector<1x1x32xf32> to vector<1x32xf32>
    %c49 = arith.constant 49 : index
    %c0_47 = arith.constant 0 : index
    %71 = vector.load %arg10[%c49, %c0_47] : memref<64x32xf32, #tpu.memory_space<vmem>>, vector<1x32xf32>
    tpu.vector_store %arg10[%c49, %c0_47], %70 {strides = array<i32>} : memref<64x32xf32, #tpu.memory_space<vmem>>, vector<1x32xf32>,
    %c14 = arith.constant 14 : index
    %72 = memref.load %arg0[%c14] : memref<16xi32, #tpu.memory_space<smem>>
    %73 = arith.index_cast %72 : i32 to index
    %c0_48 = arith.constant 0 : index
    %c0_49 = arith.constant 0 : index
    %74 = vector.load %arg1[%73, %c0_48, %c0_49] : memref<100x1x32xf32, #tpu.memory_space<vmem>>, vector<1x1x32xf32>
    %75 = vector.shape_cast %74 : vector<1x1x32xf32> to vector<1x32xf32>
    %c56 = arith.constant 56 : index
    %c0_50 = arith.constant 0 : index
    %76 = vector.load %arg10[%c56, %c0_50] : memref<64x32xf32, #tpu.memory_space<vmem>>, vector<1x32xf32>
    tpu.vector_store %arg10[%c56, %c0_50], %75 {strides = array<i32>} : memref<64x32xf32, #tpu.memory_space<vmem>>, vector<1x32xf32>,
    %c15 = arith.constant 15 : index
    %77 = memref.load %arg0[%c15] : memref<16xi32, #tpu.memory_space<smem>>
    %78 = arith.index_cast %77 : i32 to index
    %c0_51 = arith.constant 0 : index
    %c0_52 = arith.constant 0 : index
    %79 = vector.load %arg1[%78, %c0_51, %c0_52] : memref<100x1x32xf32, #tpu.memory_space<vmem>>, vector<1x1x32xf32>
    %80 = vector.shape_cast %79 : vector<1x1x32xf32> to vector<1x32xf32>
    %c57 = arith.constant 57 : index
    %c0_53 = arith.constant 0 : index
    %81 = vector.load %arg10[%c57, %c0_53] : memref<64x32xf32, #tpu.memory_space<vmem>>, vector<1x32xf32>
    tpu.vector_store %arg10[%c57, %c0_53], %80 {strides = array<i32>} : memref<64x32xf32, #tpu.memory_space<vmem>>, vector<1x32xf32>,
    %c0_54 = arith.constant 0 : index
    %c0_55 = arith.constant 0 : index
    %82 = vector.load %arg10[%c0_54, %c0_55] : memref<64x32xf32, #tpu.memory_space<vmem>>, vector<64x32xf32>
    %83 = arith.truncf %82 : vector<64x32xf32> to vector<64x32xbf16>
    %c0_56 = arith.constant 0 : index
    %c0_57 = arith.constant 0 : index
    %84 = vector.load %arg2[%c0_56, %c0_57] : memref<32x512xbf16, #tpu.memory_space<vmem>>, vector<32x512xbf16>
    %cst_58 = arith.constant dense<0.000000e+00> : vector<64x512xf32>
    %85 = tpu.matmul %83, %84, %cst_58 {dimension_numbers = #tpu.dot_dimension_numbers<[1], [0], [0], [1], [0, 0, 1, 1], [], []>} : vector<64x32xbf16>, vector<32x512xbf16>, vector<64x512xf32> -> vector<64x512xf32>
    %c0_59 = arith.constant 0 : index
    %c0_60 = arith.constant 0 : index
    %86 = vector.load %arg4[%c0_59, %c0_60] : memref<1x512xf32, #tpu.memory_space<vmem>>, vector<1x512xf32>
    %87 = vector.broadcast %86 : vector<1x512xf32> to vector<64x512xf32>
    %88 = arith.addf %85, %87 : vector<64x512xf32>
    %c0_61 = arith.constant 0 : index
    %c0_62 = arith.constant 0 : index
    %89 = vector.load %arg11[%c0_61, %c0_62] : memref<64x512xf32, #tpu.memory_space<vmem>>, vector<64x512xf32>
    tpu.vector_store %arg11[%c0_61, %c0_62], %88 {strides = array<i32>} : memref<64x512xf32, #tpu.memory_space<vmem>>, vector<64x512xf32>,
    %cst_63 = arith.constant 0.000000e+00 : f32
    %90 = vector.broadcast %cst_63 : f32 to vector<8x128xf32>
    %cst_64 = arith.constant 0.000000e+00 : f32
    %91 = vector.broadcast %cst_64 : f32 to vector<8x128xf32>
    %92 = arith.truncf %90 : vector<8x128xf32> to vector<8x128xbf16>
    %c0_65 = arith.constant 0 : index
    %c0_66 = arith.constant 0 : index
    %93 = vector.load %arg3[%c0_65, %c0_66] : memref<128x512xbf16, #tpu.memory_space<vmem>>, vector<128x512xbf16>
    %cst_67 = arith.constant dense<0.000000e+00> : vector<8x512xf32>
    %94 = tpu.matmul %92, %93, %cst_67 {dimension_numbers = #tpu.dot_dimension_numbers<[1], [0], [0], [1], [0, 0, 1, 1], [], []>} : vector<8x128xbf16>, vector<128x512xbf16>, vector<8x512xf32> -> vector<8x512xf32>
    %c0_68 = arith.constant 0 : index
    %c0_69 = arith.constant 0 : index
    %95 = vector.load %arg11[%c0_68, %c0_69] : memref<64x512xf32, #tpu.memory_space<vmem>>, vector<8x512xf32>
    %96 = arith.addf %94, %95 : vector<8x512xf32>
    %97 = vector.extract_strided_slice %96 {offsets = [0, 0], sizes = [8, 128], strides = [1, 1]} : vector<8x512xf32> to vector<8x128xf32>
    %cst_70 = arith.constant 5.000000e-01 : f32
    %98 = vector.broadcast %cst_70 : f32 to vector<8x128xf32>
    %99 = arith.mulf %98, %97 : vector<8x128xf32>
    %100 = math.tanh %99 : vector<8x128xf32>
    %cst_71 = arith.constant 5.000000e-01 : f32
    %101 = vector.broadcast %cst_71 : f32 to vector<8x128xf32>
    %102 = arith.mulf %101, %100 : vector<8x128xf32>
    %cst_72 = arith.constant 5.000000e-01 : f32
    %103 = vector.broadcast %cst_72 : f32 to vector<8x128xf32>
    %104 = arith.addf %102, %103 : vector<8x128xf32>
    %105 = vector.extract_strided_slice %96 {offsets = [0, 128], sizes = [8, 128], strides = [1, 1]} : vector<8x512xf32> to vector<8x128xf32>
    %cst_73 = arith.constant 5.000000e-01 : f32
    %106 = vector.broadcast %cst_73 : f32 to vector<8x128xf32>
    %107 = arith.mulf %106, %105 : vector<8x128xf32>
    %108 = math.tanh %107 : vector<8x128xf32>
    %cst_74 = arith.constant 5.000000e-01 : f32
    %109 = vector.broadcast %cst_74 : f32 to vector<8x128xf32>
    %110 = arith.mulf %109, %108 : vector<8x128xf32>
    %cst_75 = arith.constant 5.000000e-01 : f32
    %111 = vector.broadcast %cst_75 : f32 to vector<8x128xf32>
    %112 = arith.addf %110, %111 : vector<8x128xf32>
    %113 = vector.extract_strided_slice %96 {offsets = [0, 256], sizes = [8, 128], strides = [1, 1]} : vector<8x512xf32> to vector<8x128xf32>
    %114 = math.tanh %113 : vector<8x128xf32>
    %115 = vector.extract_strided_slice %96 {offsets = [0, 384], sizes = [8, 128], strides = [1, 1]} : vector<8x512xf32> to vector<8x128xf32>
    %cst_76 = arith.constant 5.000000e-01 : f32
    %116 = vector.broadcast %cst_76 : f32 to vector<8x128xf32>
    %117 = arith.mulf %116, %115 : vector<8x128xf32>
    %118 = math.tanh %117 : vector<8x128xf32>
    %cst_77 = arith.constant 5.000000e-01 : f32
    %119 = vector.broadcast %cst_77 : f32 to vector<8x128xf32>
    %120 = arith.mulf %119, %118 : vector<8x128xf32>
    %cst_78 = arith.constant 5.000000e-01 : f32
    %121 = vector.broadcast %cst_78 : f32 to vector<8x128xf32>
    %122 = arith.addf %120, %121 : vector<8x128xf32>
    %123 = arith.mulf %112, %91 : vector<8x128xf32>
    %124 = arith.mulf %104, %114 : vector<8x128xf32>
    %125 = arith.addf %123, %124 : vector<8x128xf32>
    %126 = math.tanh %125 : vector<8x128xf32>
    %127 = arith.mulf %122, %126 : vector<8x128xf32>
    %128 = arith.truncf %127 : vector<8x128xf32> to vector<8x128xbf16>
    %c0_79 = arith.constant 0 : index
    %c0_80 = arith.constant 0 : index
    %129 = vector.load %arg3[%c0_79, %c0_80] : memref<128x512xbf16, #tpu.memory_space<vmem>>, vector<128x512xbf16>
    %cst_81 = arith.constant dense<0.000000e+00> : vector<8x512xf32>
    %130 = tpu.matmul %128, %129, %cst_81 {dimension_numbers = #tpu.dot_dimension_numbers<[1], [0], [0], [1], [0, 0, 1, 1], [], []>} : vector<8x128xbf16>, vector<128x512xbf16>, vector<8x512xf32> -> vector<8x512xf32>
    %c8_82 = arith.constant 8 : index
    %c0_83 = arith.constant 0 : index
    %131 = vector.load %arg11[%c8_82, %c0_83] : memref<64x512xf32, #tpu.memory_space<vmem>>, vector<8x512xf32>
    %132 = arith.addf %130, %131 : vector<8x512xf32>
    %133 = vector.extract_strided_slice %132 {offsets = [0, 0], sizes = [8, 128], strides = [1, 1]} : vector<8x512xf32> to vector<8x128xf32>
    %cst_84 = arith.constant 5.000000e-01 : f32
    %134 = vector.broadcast %cst_84 : f32 to vector<8x128xf32>
    %135 = arith.mulf %134, %133 : vector<8x128xf32>
    %136 = math.tanh %135 : vector<8x128xf32>
    %cst_85 = arith.constant 5.000000e-01 : f32
    %137 = vector.broadcast %cst_85 : f32 to vector<8x128xf32>
    %138 = arith.mulf %137, %136 : vector<8x128xf32>
    %cst_86 = arith.constant 5.000000e-01 : f32
    %139 = vector.broadcast %cst_86 : f32 to vector<8x128xf32>
    %140 = arith.addf %138, %139 : vector<8x128xf32>
    %141 = vector.extract_strided_slice %132 {offsets = [0, 128], sizes = [8, 128], strides = [1, 1]} : vector<8x512xf32> to vector<8x128xf32>
    %cst_87 = arith.constant 5.000000e-01 : f32
    %142 = vector.broadcast %cst_87 : f32 to vector<8x128xf32>
    %143 = arith.mulf %142, %141 : vector<8x128xf32>
    %144 = math.tanh %143 : vector<8x128xf32>
    %cst_88 = arith.constant 5.000000e-01 : f32
    %145 = vector.broadcast %cst_88 : f32 to vector<8x128xf32>
    %146 = arith.mulf %145, %144 : vector<8x128xf32>
    %cst_89 = arith.constant 5.000000e-01 : f32
    %147 = vector.broadcast %cst_89 : f32 to vector<8x128xf32>
    %148 = arith.addf %146, %147 : vector<8x128xf32>
    %149 = vector.extract_strided_slice %132 {offsets = [0, 256], sizes = [8, 128], strides = [1, 1]} : vector<8x512xf32> to vector<8x128xf32>
    %150 = math.tanh %149 : vector<8x128xf32>
    %151 = vector.extract_strided_slice %132 {offsets = [0, 384], sizes = [8, 128], strides = [1, 1]} : vector<8x512xf32> to vector<8x128xf32>
    %cst_90 = arith.constant 5.000000e-01 : f32
    %152 = vector.broadcast %cst_90 : f32 to vector<8x128xf32>
    %153 = arith.mulf %152, %151 : vector<8x128xf32>
    %154 = math.tanh %153 : vector<8x128xf32>
    %cst_91 = arith.constant 5.000000e-01 : f32
    %155 = vector.broadcast %cst_91 : f32 to vector<8x128xf32>
    %156 = arith.mulf %155, %154 : vector<8x128xf32>
    %cst_92 = arith.constant 5.000000e-01 : f32
    %157 = vector.broadcast %cst_92 : f32 to vector<8x128xf32>
    %158 = arith.addf %156, %157 : vector<8x128xf32>
    %159 = arith.mulf %148, %125 : vector<8x128xf32>
    %160 = arith.mulf %140, %150 : vector<8x128xf32>
    %161 = arith.addf %159, %160 : vector<8x128xf32>
    %162 = math.tanh %161 : vector<8x128xf32>
    %163 = arith.mulf %158, %162 : vector<8x128xf32>
    %164 = arith.truncf %163 : vector<8x128xf32> to vector<8x128xbf16>
    %c0_93 = arith.constant 0 : index
    %c0_94 = arith.constant 0 : index
    %165 = vector.load %arg3[%c0_93, %c0_94] : memref<128x512xbf16, #tpu.memory_space<vmem>>, vector<128x512xbf16>
    %cst_95 = arith.constant dense<0.000000e+00> : vector<8x512xf32>
    %166 = tpu.matmul %164, %165, %cst_95 {dimension_numbers = #tpu.dot_dimension_numbers<[1], [0], [0], [1], [0, 0, 1, 1], [], []>} : vector<8x128xbf16>, vector<128x512xbf16>, vector<8x512xf32> -> vector<8x512xf32>
    %c16_96 = arith.constant 16 : index
    %c0_97 = arith.constant 0 : index
    %167 = vector.load %arg11[%c16_96, %c0_97] : memref<64x512xf32, #tpu.memory_space<vmem>>, vector<8x512xf32>
    %168 = arith.addf %166, %167 : vector<8x512xf32>
    %169 = vector.extract_strided_slice %168 {offsets = [0, 0], sizes = [8, 128], strides = [1, 1]} : vector<8x512xf32> to vector<8x128xf32>
    %cst_98 = arith.constant 5.000000e-01 : f32
    %170 = vector.broadcast %cst_98 : f32 to vector<8x128xf32>
    %171 = arith.mulf %170, %169 : vector<8x128xf32>
    %172 = math.tanh %171 : vector<8x128xf32>
    %cst_99 = arith.constant 5.000000e-01 : f32
    %173 = vector.broadcast %cst_99 : f32 to vector<8x128xf32>
    %174 = arith.mulf %173, %172 : vector<8x128xf32>
    %cst_100 = arith.constant 5.000000e-01 : f32
    %175 = vector.broadcast %cst_100 : f32 to vector<8x128xf32>
    %176 = arith.addf %174, %175 : vector<8x128xf32>
    %177 = vector.extract_strided_slice %168 {offsets = [0, 128], sizes = [8, 128], strides = [1, 1]} : vector<8x512xf32> to vector<8x128xf32>
    %cst_101 = arith.constant 5.000000e-01 : f32
    %178 = vector.broadcast %cst_101 : f32 to vector<8x128xf32>
    %179 = arith.mulf %178, %177 : vector<8x128xf32>
    %180 = math.tanh %179 : vector<8x128xf32>
    %cst_102 = arith.constant 5.000000e-01 : f32
    %181 = vector.broadcast %cst_102 : f32 to vector<8x128xf32>
    %182 = arith.mulf %181, %180 : vector<8x128xf32>
    %cst_103 = arith.constant 5.000000e-01 : f32
    %183 = vector.broadcast %cst_103 : f32 to vector<8x128xf32>
    %184 = arith.addf %182, %183 : vector<8x128xf32>
    %185 = vector.extract_strided_slice %168 {offsets = [0, 256], sizes = [8, 128], strides = [1, 1]} : vector<8x512xf32> to vector<8x128xf32>
    %186 = math.tanh %185 : vector<8x128xf32>
    %187 = vector.extract_strided_slice %168 {offsets = [0, 384], sizes = [8, 128], strides = [1, 1]} : vector<8x512xf32> to vector<8x128xf32>
    %cst_104 = arith.constant 5.000000e-01 : f32
    %188 = vector.broadcast %cst_104 : f32 to vector<8x128xf32>
    %189 = arith.mulf %188, %187 : vector<8x128xf32>
    %190 = math.tanh %189 : vector<8x128xf32>
    %cst_105 = arith.constant 5.000000e-01 : f32
    %191 = vector.broadcast %cst_105 : f32 to vector<8x128xf32>
    %192 = arith.mulf %191, %190 : vector<8x128xf32>
    %cst_106 = arith.constant 5.000000e-01 : f32
    %193 = vector.broadcast %cst_106 : f32 to vector<8x128xf32>
    %194 = arith.addf %192, %193 : vector<8x128xf32>
    %195 = arith.mulf %184, %161 : vector<8x128xf32>
    %196 = arith.mulf %176, %186 : vector<8x128xf32>
    %197 = arith.addf %195, %196 : vector<8x128xf32>
    %198 = math.tanh %197 : vector<8x128xf32>
    %199 = arith.mulf %194, %198 : vector<8x128xf32>
    %200 = arith.truncf %199 : vector<8x128xf32> to vector<8x128xbf16>
    %c0_107 = arith.constant 0 : index
    %c0_108 = arith.constant 0 : index
    %201 = vector.load %arg3[%c0_107, %c0_108] : memref<128x512xbf16, #tpu.memory_space<vmem>>, vector<128x512xbf16>
    %cst_109 = arith.constant dense<0.000000e+00> : vector<8x512xf32>
    %202 = tpu.matmul %200, %201, %cst_109 {dimension_numbers = #tpu.dot_dimension_numbers<[1], [0], [0], [1], [0, 0, 1, 1], [], []>} : vector<8x128xbf16>, vector<128x512xbf16>, vector<8x512xf32> -> vector<8x512xf32>
    %c24_110 = arith.constant 24 : index
    %c0_111 = arith.constant 0 : index
    %203 = vector.load %arg11[%c24_110, %c0_111] : memref<64x512xf32, #tpu.memory_space<vmem>>, vector<8x512xf32>
    %204 = arith.addf %202, %203 : vector<8x512xf32>
    %205 = vector.extract_strided_slice %204 {offsets = [0, 0], sizes = [8, 128], strides = [1, 1]} : vector<8x512xf32> to vector<8x128xf32>
    %cst_112 = arith.constant 5.000000e-01 : f32
    %206 = vector.broadcast %cst_112 : f32 to vector<8x128xf32>
    %207 = arith.mulf %206, %205 : vector<8x128xf32>
    %208 = math.tanh %207 : vector<8x128xf32>
    %cst_113 = arith.constant 5.000000e-01 : f32
    %209 = vector.broadcast %cst_113 : f32 to vector<8x128xf32>
    %210 = arith.mulf %209, %208 : vector<8x128xf32>
    %cst_114 = arith.constant 5.000000e-01 : f32
    %211 = vector.broadcast %cst_114 : f32 to vector<8x128xf32>
    %212 = arith.addf %210, %211 : vector<8x128xf32>
    %213 = vector.extract_strided_slice %204 {offsets = [0, 128], sizes = [8, 128], strides = [1, 1]} : vector<8x512xf32> to vector<8x128xf32>
    %cst_115 = arith.constant 5.000000e-01 : f32
    %214 = vector.broadcast %cst_115 : f32 to vector<8x128xf32>
    %215 = arith.mulf %214, %213 : vector<8x128xf32>
    %216 = math.tanh %215 : vector<8x128xf32>
    %cst_116 = arith.constant 5.000000e-01 : f32
    %217 = vector.broadcast %cst_116 : f32 to vector<8x128xf32>
    %218 = arith.mulf %217, %216 : vector<8x128xf32>
    %cst_117 = arith.constant 5.000000e-01 : f32
    %219 = vector.broadcast %cst_117 : f32 to vector<8x128xf32>
    %220 = arith.addf %218, %219 : vector<8x128xf32>
    %221 = vector.extract_strided_slice %204 {offsets = [0, 256], sizes = [8, 128], strides = [1, 1]} : vector<8x512xf32> to vector<8x128xf32>
    %222 = math.tanh %221 : vector<8x128xf32>
    %223 = vector.extract_strided_slice %204 {offsets = [0, 384], sizes = [8, 128], strides = [1, 1]} : vector<8x512xf32> to vector<8x128xf32>
    %cst_118 = arith.constant 5.000000e-01 : f32
    %224 = vector.broadcast %cst_118 : f32 to vector<8x128xf32>
    %225 = arith.mulf %224, %223 : vector<8x128xf32>
    %226 = math.tanh %225 : vector<8x128xf32>
    %cst_119 = arith.constant 5.000000e-01 : f32
    %227 = vector.broadcast %cst_119 : f32 to vector<8x128xf32>
    %228 = arith.mulf %227, %226 : vector<8x128xf32>
    %cst_120 = arith.constant 5.000000e-01 : f32
    %229 = vector.broadcast %cst_120 : f32 to vector<8x128xf32>
    %230 = arith.addf %228, %229 : vector<8x128xf32>
    %231 = arith.mulf %220, %197 : vector<8x128xf32>
    %232 = arith.mulf %212, %222 : vector<8x128xf32>
    %233 = arith.addf %231, %232 : vector<8x128xf32>
    %234 = math.tanh %233 : vector<8x128xf32>
    %235 = arith.mulf %230, %234 : vector<8x128xf32>
    %236 = arith.truncf %235 : vector<8x128xf32> to vector<8x128xbf16>
    %c0_121 = arith.constant 0 : index
    %c0_122 = arith.constant 0 : index
    %237 = vector.load %arg3[%c0_121, %c0_122] : memref<128x512xbf16, #tpu.memory_space<vmem>>, vector<128x512xbf16>
    %cst_123 = arith.constant dense<0.000000e+00> : vector<8x512xf32>
    %238 = tpu.matmul %236, %237, %cst_123 {dimension_numbers = #tpu.dot_dimension_numbers<[1], [0], [0], [1], [0, 0, 1, 1], [], []>} : vector<8x128xbf16>, vector<128x512xbf16>, vector<8x512xf32> -> vector<8x512xf32>
    %c32_124 = arith.constant 32 : index
    %c0_125 = arith.constant 0 : index
    %239 = vector.load %arg11[%c32_124, %c0_125] : memref<64x512xf32, #tpu.memory_space<vmem>>, vector<8x512xf32>
    %240 = arith.addf %238, %239 : vector<8x512xf32>
    %241 = vector.extract_strided_slice %240 {offsets = [0, 0], sizes = [8, 128], strides = [1, 1]} : vector<8x512xf32> to vector<8x128xf32>
    %cst_126 = arith.constant 5.000000e-01 : f32
    %242 = vector.broadcast %cst_126 : f32 to vector<8x128xf32>
    %243 = arith.mulf %242, %241 : vector<8x128xf32>
    %244 = math.tanh %243 : vector<8x128xf32>
    %cst_127 = arith.constant 5.000000e-01 : f32
    %245 = vector.broadcast %cst_127 : f32 to vector<8x128xf32>
    %246 = arith.mulf %245, %244 : vector<8x128xf32>
    %cst_128 = arith.constant 5.000000e-01 : f32
    %247 = vector.broadcast %cst_128 : f32 to vector<8x128xf32>
    %248 = arith.addf %246, %247 : vector<8x128xf32>
    %249 = vector.extract_strided_slice %240 {offsets = [0, 128], sizes = [8, 128], strides = [1, 1]} : vector<8x512xf32> to vector<8x128xf32>
    %cst_129 = arith.constant 5.000000e-01 : f32
    %250 = vector.broadcast %cst_129 : f32 to vector<8x128xf32>
    %251 = arith.mulf %250, %249 : vector<8x128xf32>
    %252 = math.tanh %251 : vector<8x128xf32>
    %cst_130 = arith.constant 5.000000e-01 : f32
    %253 = vector.broadcast %cst_130 : f32 to vector<8x128xf32>
    %254 = arith.mulf %253, %252 : vector<8x128xf32>
    %cst_131 = arith.constant 5.000000e-01 : f32
    %255 = vector.broadcast %cst_131 : f32 to vector<8x128xf32>
    %256 = arith.addf %254, %255 : vector<8x128xf32>
    %257 = vector.extract_strided_slice %240 {offsets = [0, 256], sizes = [8, 128], strides = [1, 1]} : vector<8x512xf32> to vector<8x128xf32>
    %258 = math.tanh %257 : vector<8x128xf32>
    %259 = vector.extract_strided_slice %240 {offsets = [0, 384], sizes = [8, 128], strides = [1, 1]} : vector<8x512xf32> to vector<8x128xf32>
    %cst_132 = arith.constant 5.000000e-01 : f32
    %260 = vector.broadcast %cst_132 : f32 to vector<8x128xf32>
    %261 = arith.mulf %260, %259 : vector<8x128xf32>
    %262 = math.tanh %261 : vector<8x128xf32>
    %cst_133 = arith.constant 5.000000e-01 : f32
    %263 = vector.broadcast %cst_133 : f32 to vector<8x128xf32>
    %264 = arith.mulf %263, %262 : vector<8x128xf32>
    %cst_134 = arith.constant 5.000000e-01 : f32
    %265 = vector.broadcast %cst_134 : f32 to vector<8x128xf32>
    %266 = arith.addf %264, %265 : vector<8x128xf32>
    %267 = arith.mulf %256, %233 : vector<8x128xf32>
    %268 = arith.mulf %248, %258 : vector<8x128xf32>
    %269 = arith.addf %267, %268 : vector<8x128xf32>
    %270 = math.tanh %269 : vector<8x128xf32>
    %271 = arith.mulf %266, %270 : vector<8x128xf32>
    %272 = arith.truncf %271 : vector<8x128xf32> to vector<8x128xbf16>
    %c0_135 = arith.constant 0 : index
    %c0_136 = arith.constant 0 : index
    %273 = vector.load %arg3[%c0_135, %c0_136] : memref<128x512xbf16, #tpu.memory_space<vmem>>, vector<128x512xbf16>
    %cst_137 = arith.constant dense<0.000000e+00> : vector<8x512xf32>
    %274 = tpu.matmul %272, %273, %cst_137 {dimension_numbers = #tpu.dot_dimension_numbers<[1], [0], [0], [1], [0, 0, 1, 1], [], []>} : vector<8x128xbf16>, vector<128x512xbf16>, vector<8x512xf32> -> vector<8x512xf32>
    %c40_138 = arith.constant 40 : index
    %c0_139 = arith.constant 0 : index
    %275 = vector.load %arg11[%c40_138, %c0_139] : memref<64x512xf32, #tpu.memory_space<vmem>>, vector<8x512xf32>
    %276 = arith.addf %274, %275 : vector<8x512xf32>
    %277 = vector.extract_strided_slice %276 {offsets = [0, 0], sizes = [8, 128], strides = [1, 1]} : vector<8x512xf32> to vector<8x128xf32>
    %cst_140 = arith.constant 5.000000e-01 : f32
    %278 = vector.broadcast %cst_140 : f32 to vector<8x128xf32>
    %279 = arith.mulf %278, %277 : vector<8x128xf32>
    %280 = math.tanh %279 : vector<8x128xf32>
    %cst_141 = arith.constant 5.000000e-01 : f32
    %281 = vector.broadcast %cst_141 : f32 to vector<8x128xf32>
    %282 = arith.mulf %281, %280 : vector<8x128xf32>
    %cst_142 = arith.constant 5.000000e-01 : f32
    %283 = vector.broadcast %cst_142 : f32 to vector<8x128xf32>
    %284 = arith.addf %282, %283 : vector<8x128xf32>
    %285 = vector.extract_strided_slice %276 {offsets = [0, 128], sizes = [8, 128], strides = [1, 1]} : vector<8x512xf32> to vector<8x128xf32>
    %cst_143 = arith.constant 5.000000e-01 : f32
    %286 = vector.broadcast %cst_143 : f32 to vector<8x128xf32>
    %287 = arith.mulf %286, %285 : vector<8x128xf32>
    %288 = math.tanh %287 : vector<8x128xf32>
    %cst_144 = arith.constant 5.000000e-01 : f32
    %289 = vector.broadcast %cst_144 : f32 to vector<8x128xf32>
    %290 = arith.mulf %289, %288 : vector<8x128xf32>
    %cst_145 = arith.constant 5.000000e-01 : f32
    %291 = vector.broadcast %cst_145 : f32 to vector<8x128xf32>
    %292 = arith.addf %290, %291 : vector<8x128xf32>
    %293 = vector.extract_strided_slice %276 {offsets = [0, 256], sizes = [8, 128], strides = [1, 1]} : vector<8x512xf32> to vector<8x128xf32>
    %294 = math.tanh %293 : vector<8x128xf32>
    %295 = vector.extract_strided_slice %276 {offsets = [0, 384], sizes = [8, 128], strides = [1, 1]} : vector<8x512xf32> to vector<8x128xf32>
    %cst_146 = arith.constant 5.000000e-01 : f32
    %296 = vector.broadcast %cst_146 : f32 to vector<8x128xf32>
    %297 = arith.mulf %296, %295 : vector<8x128xf32>
    %298 = math.tanh %297 : vector<8x128xf32>
    %cst_147 = arith.constant 5.000000e-01 : f32
    %299 = vector.broadcast %cst_147 : f32 to vector<8x128xf32>
    %300 = arith.mulf %299, %298 : vector<8x128xf32>
    %cst_148 = arith.constant 5.000000e-01 : f32
    %301 = vector.broadcast %cst_148 : f32 to vector<8x128xf32>
    %302 = arith.addf %300, %301 : vector<8x128xf32>
    %303 = arith.mulf %292, %269 : vector<8x128xf32>
    %304 = arith.mulf %284, %294 : vector<8x128xf32>
    %305 = arith.addf %303, %304 : vector<8x128xf32>
    %306 = math.tanh %305 : vector<8x128xf32>
    %307 = arith.mulf %302, %306 : vector<8x128xf32>
    %308 = arith.truncf %307 : vector<8x128xf32> to vector<8x128xbf16>
    %c0_149 = arith.constant 0 : index
    %c0_150 = arith.constant 0 : index
    %309 = vector.load %arg3[%c0_149, %c0_150] : memref<128x512xbf16, #tpu.memory_space<vmem>>, vector<128x512xbf16>
    %cst_151 = arith.constant dense<0.000000e+00> : vector<8x512xf32>
    %310 = tpu.matmul %308, %309, %cst_151 {dimension_numbers = #tpu.dot_dimension_numbers<[1], [0], [0], [1], [0, 0, 1, 1], [], []>} : vector<8x128xbf16>, vector<128x512xbf16>, vector<8x512xf32> -> vector<8x512xf32>
    %c48_152 = arith.constant 48 : index
    %c0_153 = arith.constant 0 : index
    %311 = vector.load %arg11[%c48_152, %c0_153] : memref<64x512xf32, #tpu.memory_space<vmem>>, vector<8x512xf32>
    %312 = arith.addf %310, %311 : vector<8x512xf32>
    %313 = vector.extract_strided_slice %312 {offsets = [0, 0], sizes = [8, 128], strides = [1, 1]} : vector<8x512xf32> to vector<8x128xf32>
    %cst_154 = arith.constant 5.000000e-01 : f32
    %314 = vector.broadcast %cst_154 : f32 to vector<8x128xf32>
    %315 = arith.mulf %314, %313 : vector<8x128xf32>
    %316 = math.tanh %315 : vector<8x128xf32>
    %cst_155 = arith.constant 5.000000e-01 : f32
    %317 = vector.broadcast %cst_155 : f32 to vector<8x128xf32>
    %318 = arith.mulf %317, %316 : vector<8x128xf32>
    %cst_156 = arith.constant 5.000000e-01 : f32
    %319 = vector.broadcast %cst_156 : f32 to vector<8x128xf32>
    %320 = arith.addf %318, %319 : vector<8x128xf32>
    %321 = vector.extract_strided_slice %312 {offsets = [0, 128], sizes = [8, 128], strides = [1, 1]} : vector<8x512xf32> to vector<8x128xf32>
    %cst_157 = arith.constant 5.000000e-01 : f32
    %322 = vector.broadcast %cst_157 : f32 to vector<8x128xf32>
    %323 = arith.mulf %322, %321 : vector<8x128xf32>
    %324 = math.tanh %323 : vector<8x128xf32>
    %cst_158 = arith.constant 5.000000e-01 : f32
    %325 = vector.broadcast %cst_158 : f32 to vector<8x128xf32>
    %326 = arith.mulf %325, %324 : vector<8x128xf32>
    %cst_159 = arith.constant 5.000000e-01 : f32
    %327 = vector.broadcast %cst_159 : f32 to vector<8x128xf32>
    %328 = arith.addf %326, %327 : vector<8x128xf32>
    %329 = vector.extract_strided_slice %312 {offsets = [0, 256], sizes = [8, 128], strides = [1, 1]} : vector<8x512xf32> to vector<8x128xf32>
    %330 = math.tanh %329 : vector<8x128xf32>
    %331 = vector.extract_strided_slice %312 {offsets = [0, 384], sizes = [8, 128], strides = [1, 1]} : vector<8x512xf32> to vector<8x128xf32>
    %cst_160 = arith.constant 5.000000e-01 : f32
    %332 = vector.broadcast %cst_160 : f32 to vector<8x128xf32>
    %333 = arith.mulf %332, %331 : vector<8x128xf32>
    %334 = math.tanh %333 : vector<8x128xf32>
    %cst_161 = arith.constant 5.000000e-01 : f32
    %335 = vector.broadcast %cst_161 : f32 to vector<8x128xf32>
    %336 = arith.mulf %335, %334 : vector<8x128xf32>
    %cst_162 = arith.constant 5.000000e-01 : f32
    %337 = vector.broadcast %cst_162 : f32 to vector<8x128xf32>
    %338 = arith.addf %336, %337 : vector<8x128xf32>
    %339 = arith.mulf %328, %305 : vector<8x128xf32>
    %340 = arith.mulf %320, %330 : vector<8x128xf32>
    %341 = arith.addf %339, %340 : vector<8x128xf32>
    %342 = math.tanh %341 : vector<8x128xf32>
    %343 = arith.mulf %338, %342 : vector<8x128xf32>
    %344 = arith.truncf %343 : vector<8x128xf32> to vector<8x128xbf16>
    %c0_163 = arith.constant 0 : index
    %c0_164 = arith.constant 0 : index
    %345 = vector.load %arg3[%c0_163, %c0_164] : memref<128x512xbf16, #tpu.memory_space<vmem>>, vector<128x512xbf16>
    %cst_165 = arith.constant dense<0.000000e+00> : vector<8x512xf32>
    %346 = tpu.matmul %344, %345, %cst_165 {dimension_numbers = #tpu.dot_dimension_numbers<[1], [0], [0], [1], [0, 0, 1, 1], [], []>} : vector<8x128xbf16>, vector<128x512xbf16>, vector<8x512xf32> -> vector<8x512xf32>
    %c56_166 = arith.constant 56 : index
    %c0_167 = arith.constant 0 : index
    %347 = vector.load %arg11[%c56_166, %c0_167] : memref<64x512xf32, #tpu.memory_space<vmem>>, vector<8x512xf32>
    %348 = arith.addf %346, %347 : vector<8x512xf32>
    %349 = vector.extract_strided_slice %348 {offsets = [0, 0], sizes = [8, 128], strides = [1, 1]} : vector<8x512xf32> to vector<8x128xf32>
    %cst_168 = arith.constant 5.000000e-01 : f32
    %350 = vector.broadcast %cst_168 : f32 to vector<8x128xf32>
    %351 = arith.mulf %350, %349 : vector<8x128xf32>
    %352 = math.tanh %351 : vector<8x128xf32>
    %cst_169 = arith.constant 5.000000e-01 : f32
    %353 = vector.broadcast %cst_169 : f32 to vector<8x128xf32>
    %354 = arith.mulf %353, %352 : vector<8x128xf32>
    %cst_170 = arith.constant 5.000000e-01 : f32
    %355 = vector.broadcast %cst_170 : f32 to vector<8x128xf32>
    %356 = arith.addf %354, %355 : vector<8x128xf32>
    %357 = vector.extract_strided_slice %348 {offsets = [0, 128], sizes = [8, 128], strides = [1, 1]} : vector<8x512xf32> to vector<8x128xf32>
    %cst_171 = arith.constant 5.000000e-01 : f32
    %358 = vector.broadcast %cst_171 : f32 to vector<8x128xf32>
    %359 = arith.mulf %358, %357 : vector<8x128xf32>
    %360 = math.tanh %359 : vector<8x128xf32>
    %cst_172 = arith.constant 5.000000e-01 : f32
    %361 = vector.broadcast %cst_172 : f32 to vector<8x128xf32>
    %362 = arith.mulf %361, %360 : vector<8x128xf32>
    %cst_173 = arith.constant 5.000000e-01 : f32
    %363 = vector.broadcast %cst_173 : f32 to vector<8x128xf32>
    %364 = arith.addf %362, %363 : vector<8x128xf32>
    %365 = vector.extract_strided_slice %348 {offsets = [0, 256], sizes = [8, 128], strides = [1, 1]} : vector<8x512xf32> to vector<8x128xf32>
    %366 = math.tanh %365 : vector<8x128xf32>
    %367 = vector.extract_strided_slice %348 {offsets = [0, 384], sizes = [8, 128], strides = [1, 1]} : vector<8x512xf32> to vector<8x128xf32>
    %cst_174 = arith.constant 5.000000e-01 : f32
    %368 = vector.broadcast %cst_174 : f32 to vector<8x128xf32>
    %369 = arith.mulf %368, %367 : vector<8x128xf32>
    %370 = math.tanh %369 : vector<8x128xf32>
    %cst_175 = arith.constant 5.000000e-01 : f32
    %371 = vector.broadcast %cst_175 : f32 to vector<8x128xf32>
    %372 = arith.mulf %371, %370 : vector<8x128xf32>
    %cst_176 = arith.constant 5.000000e-01 : f32
    %373 = vector.broadcast %cst_176 : f32 to vector<8x128xf32>
    %374 = arith.addf %372, %373 : vector<8x128xf32>
    %375 = arith.mulf %364, %341 : vector<8x128xf32>
    %376 = arith.mulf %356, %366 : vector<8x128xf32>
    %377 = arith.addf %375, %376 : vector<8x128xf32>
    %378 = math.tanh %377 : vector<8x128xf32>
    %379 = arith.mulf %374, %378 : vector<8x128xf32>
    %380 = arith.truncf %379 : vector<8x128xf32> to vector<8x128xbf16>
    %c0_177 = arith.constant 0 : index
    %c0_178 = arith.constant 0 : index
    %381 = vector.load %arg5[%c0_177, %c0_178] : memref<128x128xbf16, #tpu.memory_space<vmem>>, vector<128x128xbf16>
    %cst_179 = arith.constant dense<0.000000e+00> : vector<8x128xf32>
    %382 = tpu.matmul %380, %381, %cst_179 {dimension_numbers = #tpu.dot_dimension_numbers<[1], [0], [0], [1], [0, 0, 1, 1], [], []>} : vector<8x128xbf16>, vector<128x128xbf16>, vector<8x128xf32> -> vector<8x128xf32>
    %c0_180 = arith.constant 0 : index
    %c0_181 = arith.constant 0 : index
    %383 = vector.load %arg6[%c0_180, %c0_181] : memref<1x128xf32, #tpu.memory_space<vmem>>, vector<1x128xf32>
    %384 = vector.broadcast %383 : vector<1x128xf32> to vector<8x128xf32>
    %385 = arith.addf %382, %384 : vector<8x128xf32>
    %386 = math.tanh %385 : vector<8x128xf32>
    %387 = arith.truncf %386 : vector<8x128xf32> to vector<8x128xbf16>
    %c0_182 = arith.constant 0 : index
    %c0_183 = arith.constant 0 : index
    %388 = vector.load %arg7[%c0_182, %c0_183] : memref<128x128xbf16, #tpu.memory_space<vmem>>, vector<128x128xbf16>
    %cst_184 = arith.constant dense<0.000000e+00> : vector<8x128xf32>
    %389 = tpu.matmul %387, %388, %cst_184 {dimension_numbers = #tpu.dot_dimension_numbers<[1], [0], [0], [1], [0, 0, 1, 1], [], []>} : vector<8x128xbf16>, vector<128x128xbf16>, vector<8x128xf32> -> vector<8x128xf32>
    %c0_185 = arith.constant 0 : index
    %c0_186 = arith.constant 0 : index
    %390 = vector.load %arg8[%c0_185, %c0_186] : memref<1x128xf32, #tpu.memory_space<vmem>>, vector<1x128xf32>
    %391 = vector.broadcast %390 : vector<1x128xf32> to vector<8x128xf32>
    %392 = arith.addf %389, %391 : vector<8x128xf32>
    %c0_187 = arith.constant 0 : index
    %c0_188 = arith.constant 0 : index
    %393 = vector.load %arg9[%c0_187, %c0_188] : memref<8x128xf32, #tpu.memory_space<vmem>>, vector<8x128xf32>
    tpu.vector_store %arg9[%c0_187, %c0_188], %392 {strides = array<i32>} : memref<8x128xf32, #tpu.memory_space<vmem>>, vector<8x128xf32>,
    return
  }
}

</mosaic_0001>

<llo_original>
// kernel: rnn_forward.1
$region0: #{rnn_forward.1}
  #allocation0 [shape = 'u32[]', space=smem, size = 0x4, offset = 0x4, fixed_abs, tag = 'smem constant byte address 0x4 - core index']
  #allocation1 [shape = 'u32[144,128]{1,0:T(1,128)}', space=vmem, size = 0x12000, scoped, tag = 'internal scratch']
  #allocation2 [shape = 'f32[64,32]{1,0:T(8,128)}', space=vmem, size = 0x8000, scoped, tag = 'scratch operand']
  #allocation3 [shape = 'f32[64,512]{1,0:T(8,128)}', space=vmem, size = 0x20000, scoped, tag = 'scratch operand']
  %s0 = inlined_call_operand.vmem [shape: s32[16], index: 0, kind: input, shape index: {}]
  %s1 = inlined_call_operand.vmem [shape: f32[100,1,32], index: 1, kind: input, shape index: {}]
  %s2 = inlined_call_operand.vmem [shape: bf16[32,512], index: 2, kind: input, shape index: {}]
  %s3 = inlined_call_operand.hbm [shape: bf16[128,512], index: 3, kind: input, shape index: {}]
  %s4 = inlined_call_operand.vmem [shape: f32[1,512], index: 4, kind: input, shape index: {}]
  %s5 = inlined_call_operand.vmem [shape: bf16[128,128], index: 5, kind: input, shape index: {}]
  %s6 = inlined_call_operand.vmem [shape: f32[1,128], index: 6, kind: input, shape index: {}]
  %s7 = inlined_call_operand.hbm [shape: bf16[128,128], index: 7, kind: input, shape index: {}]
  %s8 = inlined_call_operand.vmem [shape: f32[1,128], index: 8, kind: input, shape index: {}]
  %s9 = inlined_call_operand.vmem [shape: f32[8,128], index: 9, kind: output, shape index: {}]
  %s10 = sld [smem:[#allocation0]]
  $region58: #{rnn_forward.1} parent=0
    _
  %s12 = ssub.s32 1, %s10
  %s13 = scalar_select 0, %s12, %s10
  $region1: #{rnn_forward.1} parent=0
    #allocation4 [shape = 'u8[512]{0}', space=smem, size = 0x200, scoped, tag = 'input window, operand 0, single buffered']
    #allocation5 [shape = 's32[1]{0}', space=sflag, size = 0x4, scoped, tag = 'scoped memory for rnn_forward.1']
    #allocation6 [shape = 's32[1]{0}', space=sflag, size = 0x4, scoped, tag = 'scoped memory for rnn_forward.1']
    #allocation7 [shape = 'u8[131072]{0}', space=vmem, size = 0x20000, scoped, tag = 'input window, operand 3, single buffered']
    #allocation8 [shape = 'u8[32768]{0}', space=vmem, size = 0x8000, scoped, tag = 'input window, operand 7, single buffered']
    #allocation9 [shape = 's32[1]{0}', space=sflag, size = 0x4, scoped, tag = 'scoped memory for rnn_forward.1']
    %14 = vsyncpa [#allocation6], 0
    %15 = vsyncpa [#allocation5], 0
    %16 = vsyncpa [#allocation9], 0
    // Predicated region
    $region2: #{rnn_forward.1} parent=1 // pred_check
      _
    $region3: #{rnn_forward.1} parent=1 // pred_check_branch
      %18 = sbr.rel (0) target = $region5
    $region4: #{rnn_forward.1} parent=1 // pred_region
      %s20 = ssub.s32 16, 16
      %21 = vsyncadd [#allocation6], %s20
      %s23 = sshll.u32 %s0, 4
      %s24 = int_to_ptr.vmem [resolvable:$true] %s23
      %26 = dma.vmem_to_smem %s24, 16, [#allocation4], [#allocation6]
    $region5: #{rnn_forward.1} parent=1 // pred_fallthru
      _
    // Predicated region
    $region6: #{rnn_forward.1} parent=1 // pred_check
      _
    $region7: #{rnn_forward.1} parent=1 // pred_check_branch
      %28 = sbr.rel (0) target = $region9
    $region8: #{rnn_forward.1} parent=1 // pred_region
      _
    $region9: #{rnn_forward.1} parent=1 // pred_fallthru
      _
    // Predicated region
    $region10: #{rnn_forward.1} parent=1 // pred_check
      _
    $region11: #{rnn_forward.1} parent=1 // pred_check_branch
      %30 = sbr.rel (0) target = $region13
    $region12: #{rnn_forward.1} parent=1 // pred_region
      _
    $region13: #{rnn_forward.1} parent=1 // pred_fallthru
      _
    // Predicated region
    $region14: #{rnn_forward.1} parent=1 // pred_check
      _
    $region15: #{rnn_forward.1} parent=1 // pred_check_branch
      %32 = sbr.rel (0) target = $region17
    $region16: #{rnn_forward.1} parent=1 // pred_region
      %s34 = ssub.s32 4096, 4096
      %35 = vsyncadd [#allocation5], %s34
      %s36 = sshll.u32 [#allocation7], 4
      %s37 = int_to_ptr.vmem [resolvable:$true] %s36
      %42 = dma.hbm_to_vmem [thread:$0]  %s3, 4096, %s37, [#allocation5], 256, 256, 16
    $region17: #{rnn_forward.1} parent=1 // pred_fallthru
      _
    // Predicated region
    $region18: #{rnn_forward.1} parent=1 // pred_check
      _
    $region19: #{rnn_forward.1} parent=1 // pred_check_branch
      %44 = sbr.rel (0) target = $region21
    $region20: #{rnn_forward.1} parent=1 // pred_region
      _
    $region21: #{rnn_forward.1} parent=1 // pred_fallthru
      _
    // Predicated region
    $region22: #{rnn_forward.1} parent=1 // pred_check
      _
    $region23: #{rnn_forward.1} parent=1 // pred_check_branch
      %46 = sbr.rel (0) target = $region25
    $region24: #{rnn_forward.1} parent=1 // pred_region
      _
    $region25: #{rnn_forward.1} parent=1 // pred_fallthru
      _
    // Predicated region
    $region26: #{rnn_forward.1} parent=1 // pred_check
      _
    $region27: #{rnn_forward.1} parent=1 // pred_check_branch
      %48 = sbr.rel (0) target = $region29
    $region28: #{rnn_forward.1} parent=1 // pred_region
      _
    $region29: #{rnn_forward.1} parent=1 // pred_fallthru
      _
    // Predicated region
    $region30: #{rnn_forward.1} parent=1 // pred_check
      _
    $region31: #{rnn_forward.1} parent=1 // pred_check_branch
      %50 = sbr.rel (0) target = $region33
    $region32: #{rnn_forward.1} parent=1 // pred_region
      %s52 = ssub.s32 1024, 1024
      %53 = vsyncadd [#allocation9], %s52
      %s54 = sshll.u32 [#allocation8], 4
      %s55 = int_to_ptr.vmem [resolvable:$true] %s54
      %60 = dma.hbm_to_vmem [thread:$0]  %s7, 1024, %s55, [#allocation9], 64, 64, 4
    $region33: #{rnn_forward.1} parent=1 // pred_fallthru
      _
    // Predicated region
    $region34: #{rnn_forward.1} parent=1 // pred_check
      _
    $region35: #{rnn_forward.1} parent=1 // pred_check_branch
      %62 = sbr.rel (0) target = $region37
    $region36: #{rnn_forward.1} parent=1 // pred_region
      _
    $region37: #{rnn_forward.1} parent=1 // pred_fallthru
      _
    // Predicated region
    $region38: #{rnn_forward.1} parent=1 // pred_check
      _
    $region39: #{rnn_forward.1} parent=1 // pred_check_branch
      %64 = sbr.rel (0) target = $region41
    $region40: #{rnn_forward.1} parent=1 // pred_region
      %65 = dma.done [#allocation6], 16
    $region41: #{rnn_forward.1} parent=1 // pred_fallthru
      _
    // Predicated region
    $region42: #{rnn_forward.1} parent=1 // pred_check
      _
    $region43: #{rnn_forward.1} parent=1 // pred_check_branch
      %67 = sbr.rel (0) target = $region45
    $region44: #{rnn_forward.1} parent=1 // pred_region
      %68 = dma.done [#allocation5], 4096
    $region45: #{rnn_forward.1} parent=1 // pred_fallthru
      _
    // Predicated region
    $region46: #{rnn_forward.1} parent=1 // pred_check
      _
    $region47: #{rnn_forward.1} parent=1 // pred_check_branch
      %70 = sbr.rel (0) target = $region49
    $region48: #{rnn_forward.1} parent=1 // pred_region
      %71 = dma.done [#allocation9], 1024
    $region49: #{rnn_forward.1} parent=1 // pred_fallthru
      _
    %72 = sfence
    %vm74 = vcmask 261120
    %75 = vst.msk [vmem:[#allocation2] sm:$0xff] %vm74, 0.0
    %76 = vst.msk [vmem:[#allocation2 + $0x8] sm:$0xff] %vm74, 0.0
    %77 = vst.msk [vmem:[#allocation2 + $0x10] sm:$0xff] %vm74, 0.0
    %78 = vst.msk [vmem:[#allocation2 + $0x18] sm:$0xff] %vm74, 0.0
    %79 = vst.msk [vmem:[#allocation2 + $0x20] sm:$0xff] %vm74, 0.0
    %80 = vst.msk [vmem:[#allocation2 + $0x28] sm:$0xff] %vm74, 0.0
    %81 = vst.msk [vmem:[#allocation2 + $0x30] sm:$0xff] %vm74, 0.0
    %82 = vst.msk [vmem:[#allocation2 + $0x38] sm:$0xff] %vm74, 0.0
    %s83 = sld [smem:[#allocation4]]
    %s84 = scalar_lea.vmem %s1, %s83
    %v85 = vld [vmem:[%s84] sm:$0x1]
    %vm86 = vcmask 253952
    %87 = vst.msk [vmem:[#allocation2] sm:$0x1] %vm86, %v85
    %s88 = sld [smem:[#allocation4 + $0x1]]
    %s89 = scalar_lea.vmem %s1, %s88
    %v90 = vld [vmem:[%s89] sm:$0x1]
    %91 = vst.msk [vmem:[#allocation2 + $0x1] sm:$0x1] %vm86, %v90
    %s92 = sld [smem:[#allocation4 + $0x2]]
    %s93 = scalar_lea.vmem %s1, %s92
    %v94 = vld [vmem:[%s93] sm:$0x1]
    %95 = vst.msk [vmem:[#allocation2 + $0x8] sm:$0x1] %vm86, %v94
    %s96 = sld [smem:[#allocation4 + $0x3]]
    %s97 = scalar_lea.vmem %s1, %s96
    %v98 = vld [vmem:[%s97] sm:$0x1]
    %99 = vst.msk [vmem:[#allocation2 + $0x9] sm:$0x1] %vm86, %v98
    %s100 = sld [smem:[#allocation4 + $0x4]]
    %s101 = scalar_lea.vmem %s1, %s100
    %v102 = vld [vmem:[%s101] sm:$0x1]
    %103 = vst.msk [vmem:[#allocation2 + $0x10] sm:$0x1] %vm86, %v102
    %s104 = sld [smem:[#allocation4 + $0x5]]
    %s105 = scalar_lea.vmem %s1, %s104
    %v106 = vld [vmem:[%s105] sm:$0x1]
    %107 = vst.msk [vmem:[#allocation2 + $0x11] sm:$0x1] %vm86, %v106
    %s108 = sld [smem:[#allocation4 + $0x6]]
    %s109 = scalar_lea.vmem %s1, %s108
    %v110 = vld [vmem:[%s109] sm:$0x1]
    %111 = vst.msk [vmem:[#allocation2 + $0x18] sm:$0x1] %vm86, %v110
    %s112 = sld [smem:[#allocation4 + $0x7]]
    %s113 = scalar_lea.vmem %s1, %s112
    %v114 = vld [vmem:[%s113] sm:$0x1]
    %115 = vst.msk [vmem:[#allocation2 + $0x19] sm:$0x1] %vm86, %v114
    %s116 = sld [smem:[#allocation4 + $0x8]]
    %s117 = scalar_lea.vmem %s1, %s116
    %v118 = vld [vmem:[%s117] sm:$0x1]
    %119 = vst.msk [vmem:[#allocation2 + $0x20] sm:$0x1] %vm86, %v118
    %s120 = sld [smem:[#allocation4 + $0x9]]
    %s121 = scalar_lea.vmem %s1, %s120
    %v122 = vld [vmem:[%s121] sm:$0x1]
    %123 = vst.msk [vmem:[#allocation2 + $0x21] sm:$0x1] %vm86, %v122
    %s124 = sld [smem:[#allocation4 + $0xa]]
    %s125 = scalar_lea.vmem %s1, %s124
    %v126 = vld [vmem:[%s125] sm:$0x1]
    %127 = vst.msk [vmem:[#allocation2 + $0x28] sm:$0x1] %vm86, %v126
    %s128 = sld [smem:[#allocation4 + $0xb]]
    %s129 = scalar_lea.vmem %s1, %s128
    %v130 = vld [vmem:[%s129] sm:$0x1]
    %131 = vst.msk [vmem:[#allocation2 + $0x29] sm:$0x1] %vm86, %v130
    %s132 = sld [smem:[#allocation4 + $0xc]]
    %s133 = scalar_lea.vmem %s1, %s132
    %v134 = vld [vmem:[%s133] sm:$0x1]
    %135 = vst.msk [vmem:[#allocation2 + $0x30] sm:$0x1] %vm86, %v134
    %s136 = sld [smem:[#allocation4 + $0xd]]
    %s137 = scalar_lea.vmem %s1, %s136
    %v138 = vld [vmem:[%s137] sm:$0x1]
    %139 = vst.msk [vmem:[#allocation2 + $0x31] sm:$0x1] %vm86, %v138
    %s140 = sld [smem:[#allocation4 + $0xe]]
    %s141 = scalar_lea.vmem %s1, %s140
    %v142 = vld [vmem:[%s141] sm:$0x1]
    %143 = vst.msk [vmem:[#allocation2 + $0x38] sm:$0x1] %vm86, %v142
    %s144 = sld [smem:[#allocation4 + $0xf]]
    %s145 = scalar_lea.vmem %s1, %s144
    %v146 = vld [vmem:[%s145] sm:$0x1]
    %147 = vst.msk [vmem:[#allocation2 + $0x39] sm:$0x1] %vm86, %v146
    %v148 = vld [vmem:[#allocation2] sm:$0xff]
    %v149 = vld [vmem:[#allocation2 + $0x8] sm:$0xff]
    %v150 = vld [vmem:[#allocation2 + $0x10] sm:$0xff]
    %v151 = vld [vmem:[#allocation2 + $0x18] sm:$0xff]
    %v152 = vld [vmem:[#allocation2 + $0x20] sm:$0xff]
    %v153 = vld [vmem:[#allocation2 + $0x28] sm:$0xff]
    %v154 = vld [vmem:[#allocation2 + $0x30] sm:$0xff]
    %v155 = vld [vmem:[#allocation2 + $0x38] sm:$0xff]
    %v156 = vpack.c.bf16 %v149, %v148
    %v157 = vpack.c.bf16 %v151, %v150
    %v158 = vpack.c.bf16 %v153, %v152
    %v159 = vpack.c.bf16 %v155, %v154
    %v160 = vld [vmem:[%s2] sm:$0xff]
    %v161 = vld [vmem:[%s2 + $0x8] sm:$0xff]
    %v162 = vld [vmem:[%s2 + $0x10] sm:$0xff]
    %v163 = vld [vmem:[%s2 + $0x18] sm:$0xff]
    %v164 = vld [vmem:[%s2 + $0x20] sm:$0xff]
    %v165 = vld [vmem:[%s2 + $0x28] sm:$0xff]
    %v166 = vld [vmem:[%s2 + $0x30] sm:$0xff]
    %v167 = vld [vmem:[%s2 + $0x38] sm:$0xff]
    %v168 = vld [vmem:[%s4] sm:$0xf]
    %v170 = vlaneseq
    %v171 = vshrl.u32 %v170, 7
    %v172 = vsub.s32 0, %v171
    %v173 = vrot.slane %v168, %v172
    %v174 = vlaneseq
    %v175 = vshrl.u32 %v174, 7
    %v176 = vsub.s32 1, %v175
    %v177 = vrot.slane %v168, %v176
    %v178 = vlaneseq
    %v179 = vshrl.u32 %v178, 7
    %v180 = vsub.s32 2, %v179
    %v181 = vrot.slane %v168, %v180
    %v182 = vlaneseq
    %v183 = vshrl.u32 %v182, 7
    %v184 = vsub.s32 3, %v183
    %v185 = vrot.slane %v168, %v184
    %v198 = vunpack.c.l.b16 %v160
    %v199 = vunpack.c.h.b16 %v160
    %v200 = vunpack.c.l.b16 %v161
    %v201 = vunpack.c.h.b16 %v161
    %v202 = vunpack.c.l.b16 %v162
    %v203 = vunpack.c.h.b16 %v162
    %v204 = vunpack.c.l.b16 %v163
    %v205 = vunpack.c.h.b16 %v163
    %v206 = vunpack.c.l.b16 %v164
    %v207 = vunpack.c.h.b16 %v164
    %v208 = vunpack.c.l.b16 %v165
    %v209 = vunpack.c.h.b16 %v165
    %v210 = vunpack.c.l.b16 %v166
    %v211 = vunpack.c.h.b16 %v166
    %v212 = vunpack.c.l.b16 %v167
    %v213 = vunpack.c.h.b16 %v167
    %v214 = vpack.c.b16 %v202, %v198
    %v215 = vpack.c.b16 %v203, %v199
    %v216 = vpack.c.b16 %v204, %v200
    %v217 = vpack.c.b16 %v205, %v201
    %v218 = vpack.c.b16 %v210, %v206
    %v219 = vpack.c.b16 %v211, %v207
    %v220 = vpack.c.b16 %v212, %v208
    %v221 = vpack.c.b16 %v213, %v209
    %v231 = vsel %vm74, %v156, 0
    %v234 = vsel %vm74, %v157, 0
    %v237 = vsel %vm74, %v158, 0
    %v240 = vsel %vm74, %v159, 0
    %242 = vmatprep.subr.bf16.mxu0 0
    %243 = vmatpush1.bf16.msra.mxu0 0
    %244 = vmatprep.subr.bf16.mxu0 0
    %245 = vmatpush1.bf16.msra.mxu0 0
    %246 = vmatprep.subr.bf16.mxu0 0
    %247 = vmatpush1.bf16.msra.mxu0 0
    %248 = vmatprep.subr.bf16.mxu0 0
    %249 = vmatpush1.bf16.msra.mxu0 0
    %250 = vmatprep.subr.bf16.mxu0 0
    %251 = vmatpush1.bf16.msra.mxu0 0
    %252 = vmatprep.subr.bf16.mxu0 0
    %253 = vmatpush1.bf16.msra.mxu0 0
    %254 = vmatprep.subr.bf16.mxu0 %v219
    %255 = vmatpush1.bf16.msra.mxu0 %v218
    %256 = vmatprep.subr.bf16.mxu0 %v215
    %257 = vmatpush1.bf16.msra.mxu0 %v214
    %258 = vmatprep.subr.bf16.mxu0 0
    %259 = vmatpush2.bf16.msra.mxu0 0
    %260 = vmatprep.subr.bf16.mxu0 0
    %261 = vmatpush2.bf16.msra.mxu0 0
    %262 = vmatprep.subr.bf16.mxu0 0
    %263 = vmatpush2.bf16.msra.mxu0 0
    %264 = vmatprep.subr.bf16.mxu0 0
    %265 = vmatpush2.bf16.msra.mxu0 0
    %266 = vmatprep.subr.bf16.mxu0 0
    %267 = vmatpush2.bf16.msra.mxu0 0
    %268 = vmatprep.subr.bf16.mxu0 0
    %269 = vmatpush2.bf16.msra.mxu0 0
    %270 = vmatprep.subr.bf16.mxu0 0
    %271 = vmatpush2.bf16.msra.mxu0 0
    %272 = vmatprep.subr.bf16.mxu0 0
    %273 = vmatpush2.bf16.msra.mxu0 0
    %274 = vmatprep.mubr.bf16.mxu0 0
    %275 = vmatmul.mubr.bf16.gmra.mxu0 %v231
    %v276 = vpop.f32.mrf.mxu0
    %v277 = vadd.f32 %v173, %v276
    %v278 = vpop.f32.mrf.mxu0
    %v279 = vadd.f32 %v177, %v278
    %v280 = vpop.f32.mrf.mxu0
    %v281 = vadd.f32 %v173, %v280
    %v282 = vpop.f32.mrf.mxu0
    %v283 = vadd.f32 %v177, %v282
    %284 = vmatprep.mubr.bf16.mxu0 0
    %285 = vmatmul.mubr.bf16.gmra.mxu0 %v234
    %v286 = vpop.f32.mrf.mxu0
    %v287 = vadd.f32 %v173, %v286
    %v288 = vpop.f32.mrf.mxu0
    %v289 = vadd.f32 %v177, %v288
    %v290 = vpop.f32.mrf.mxu0
    %v291 = vadd.f32 %v173, %v290
    %v292 = vpop.f32.mrf.mxu0
    %v293 = vadd.f32 %v177, %v292
    %294 = vmatprep.mubr.bf16.mxu0 0
    %295 = vmatmul.mubr.bf16.gmra.mxu0 %v237
    %v296 = vpop.f32.mrf.mxu0
    %v297 = vadd.f32 %v173, %v296
    %v298 = vpop.f32.mrf.mxu0
    %v299 = vadd.f32 %v177, %v298
    %v300 = vpop.f32.mrf.mxu0
    %v301 = vadd.f32 %v173, %v300
    %v302 = vpop.f32.mrf.mxu0
    %v303 = vadd.f32 %v177, %v302
    %304 = vmatprep.mubr.bf16.mxu0 0
    %305 = vmatmul.mubr.bf16.gmra.mxu0 %v240
    %v306 = vpop.f32.mrf.mxu0
    %v307 = vadd.f32 %v173, %v306
    %v308 = vpop.f32.mrf.mxu0
    %v309 = vadd.f32 %v177, %v308
    %v310 = vpop.f32.mrf.mxu0
    %v311 = vadd.f32 %v173, %v310
    %v312 = vpop.f32.mrf.mxu0
    %v313 = vadd.f32 %v177, %v312
    %314 = vdwg.mxu0
    %315 = vmatprep.subr.bf16.mxu0 0
    %316 = vmatpush1.bf16.msra.mxu0 0
    %317 = vmatprep.subr.bf16.mxu0 0
    %318 = vmatpush1.bf16.msra.mxu0 0
    %319 = vmatprep.subr.bf16.mxu0 0
    %320 = vmatpush1.bf16.msra.mxu0 0
    %321 = vmatprep.subr.bf16.mxu0 0
    %322 = vmatpush1.bf16.msra.mxu0 0
    %323 = vmatprep.subr.bf16.mxu0 0
    %324 = vmatpush1.bf16.msra.mxu0 0
    %325 = vmatprep.subr.bf16.mxu0 0
    %326 = vmatpush1.bf16.msra.mxu0 0
    %327 = vmatprep.subr.bf16.mxu0 %v221
    %328 = vmatpush1.bf16.msra.mxu0 %v220
    %329 = vmatprep.subr.bf16.mxu0 %v217
    %330 = vmatpush1.bf16.msra.mxu0 %v216
    %331 = vmatprep.subr.bf16.mxu0 0
    %332 = vmatpush2.bf16.msra.mxu0 0
    %333 = vmatprep.subr.bf16.mxu0 0
    %334 = vmatpush2.bf16.msra.mxu0 0
    %335 = vmatprep.subr.bf16.mxu0 0
    %336 = vmatpush2.bf16.msra.mxu0 0
    %337 = vmatprep.subr.bf16.mxu0 0
    %338 = vmatpush2.bf16.msra.mxu0 0
    %339 = vmatprep.subr.bf16.mxu0 0
    %340 = vmatpush2.bf16.msra.mxu0 0
    %341 = vmatprep.subr.bf16.mxu0 0
    %342 = vmatpush2.bf16.msra.mxu0 0
    %343 = vmatprep.subr.bf16.mxu0 0
    %344 = vmatpush2.bf16.msra.mxu0 0
    %345 = vmatprep.subr.bf16.mxu0 0
    %346 = vmatpush2.bf16.msra.mxu0 0
    %347 = vmatprep.mubr.bf16.mxu0 0
    %348 = vmatmul.mubr.bf16.gmra.mxu0 %v231
    %v349 = vpop.f32.mrf.mxu0
    %v350 = vadd.f32 %v181, %v349
    %v351 = vpop.f32.mrf.mxu0
    %v352 = vadd.f32 %v185, %v351
    %v353 = vpop.f32.mrf.mxu0
    %v354 = vadd.f32 %v181, %v353
    %v355 = vpop.f32.mrf.mxu0
    %v356 = vadd.f32 %v185, %v355
    %357 = vmatprep.mubr.bf16.mxu0 0
    %358 = vmatmul.mubr.bf16.gmra.mxu0 %v234
    %v359 = vpop.f32.mrf.mxu0
    %v360 = vadd.f32 %v181, %v359
    %v361 = vpop.f32.mrf.mxu0
    %v362 = vadd.f32 %v185, %v361
    %v363 = vpop.f32.mrf.mxu0
    %v364 = vadd.f32 %v181, %v363
    %v365 = vpop.f32.mrf.mxu0
    %v366 = vadd.f32 %v185, %v365
    %367 = vmatprep.mubr.bf16.mxu0 0
    %368 = vmatmul.mubr.bf16.gmra.mxu0 %v237
    %v369 = vpop.f32.mrf.mxu0
    %v370 = vadd.f32 %v181, %v369
    %v371 = vpop.f32.mrf.mxu0
    %v372 = vadd.f32 %v185, %v371
    %v373 = vpop.f32.mrf.mxu0
    %v374 = vadd.f32 %v181, %v373
    %v375 = vpop.f32.mrf.mxu0
    %v376 = vadd.f32 %v185, %v375
    %377 = vmatprep.mubr.bf16.mxu0 0
    %378 = vmatmul.mubr.bf16.gmra.mxu0 %v240
    %v379 = vpop.f32.mrf.mxu0
    %v380 = vadd.f32 %v181, %v379
    %v381 = vpop.f32.mrf.mxu0
    %v382 = vadd.f32 %v185, %v381
    %v383 = vpop.f32.mrf.mxu0
    %v384 = vadd.f32 %v181, %v383
    %v385 = vpop.f32.mrf.mxu0
    %v386 = vadd.f32 %v185, %v385
    %387 = vdwg.mxu0
    %388 = vst [vmem:[#allocation3] sm:$0xff] %v277
    %389 = vst [vmem:[#allocation3 + $0x8] sm:$0xff] %v279
    %390 = vst [vmem:[#allocation3 + $0x10] sm:$0xff] %v350
    %391 = vst [vmem:[#allocation3 + $0x18] sm:$0xff] %v352
    %392 = vst [vmem:[#allocation3 + $0x20] sm:$0xff] %v281
    %393 = vst [vmem:[#allocation3 + $0x28] sm:$0xff] %v283
    %394 = vst [vmem:[#allocation3 + $0x30] sm:$0xff] %v354
    %395 = vst [vmem:[#allocation3 + $0x38] sm:$0xff] %v356
    %396 = vst [vmem:[#allocation3 + $0x40] sm:$0xff] %v287
    %397 = vst [vmem:[#allocation3 + $0x48] sm:$0xff] %v289
    %398 = vst [vmem:[#allocation3 + $0x50] sm:$0xff] %v360
    %399 = vst [vmem:[#allocation3 + $0x58] sm:$0xff] %v362
    %400 = vst [vmem:[#allocation3 + $0x60] sm:$0xff] %v291
    %401 = vst [vmem:[#allocation3 + $0x68] sm:$0xff] %v293
    %402 = vst [vmem:[#allocation3 + $0x70] sm:$0xff] %v364
    %403 = vst [vmem:[#allocation3 + $0x78] sm:$0xff] %v366
    %404 = vst [vmem:[#allocation3 + $0x80] sm:$0xff] %v297
    %405 = vst [vmem:[#allocation3 + $0x88] sm:$0xff] %v299
    %406 = vst [vmem:[#allocation3 + $0x90] sm:$0xff] %v370
    %407 = vst [vmem:[#allocation3 + $0x98] sm:$0xff] %v372
    %408 = vst [vmem:[#allocation3 + $0xa0] sm:$0xff] %v301
    %409 = vst [vmem:[#allocation3 + $0xa8] sm:$0xff] %v303
    %410 = vst [vmem:[#allocation3 + $0xb0] sm:$0xff] %v374
    %411 = vst [vmem:[#allocation3 + $0xb8] sm:$0xff] %v376
    %412 = vst [vmem:[#allocation3 + $0xc0] sm:$0xff] %v307
    %413 = vst [vmem:[#allocation3 + $0xc8] sm:$0xff] %v309
    %414 = vst [vmem:[#allocation3 + $0xd0] sm:$0xff] %v380
    %415 = vst [vmem:[#allocation3 + $0xd8] sm:$0xff] %v382
    %416 = vst [vmem:[#allocation3 + $0xe0] sm:$0xff] %v311
    %417 = vst [vmem:[#allocation3 + $0xe8] sm:$0xff] %v313
    %418 = vst [vmem:[#allocation3 + $0xf0] sm:$0xff] %v384
    %419 = vst [vmem:[#allocation3 + $0xf8] sm:$0xff] %v386
    %v420 = vld [vmem:[#allocation7] sm:$0xff]
    %v421 = vld [vmem:[#allocation7 + $0x8] sm:$0xff]
    %v422 = vld [vmem:[#allocation7 + $0x10] sm:$0xff]
    %v423 = vld [vmem:[#allocation7 + $0x18] sm:$0xff]
    %v424 = vld [vmem:[#allocation7 + $0x20] sm:$0xff]
    %v425 = vld [vmem:[#allocation7 + $0x28] sm:$0xff]
    %v426 = vld [vmem:[#allocation7 + $0x30] sm:$0xff]
    %v427 = vld [vmem:[#allocation7 + $0x38] sm:$0xff]
    %v428 = vld [vmem:[#allocation7 + $0x40] sm:$0xff]
    %v429 = vld [vmem:[#allocation7 + $0x48] sm:$0xff]
    %v430 = vld [vmem:[#allocation7 + $0x50] sm:$0xff]
    %v431 = vld [vmem:[#allocation7 + $0x58] sm:$0xff]
    %v432 = vld [vmem:[#allocation7 + $0x60] sm:$0xff]
    %v433 = vld [vmem:[#allocation7 + $0x68] sm:$0xff]
    %v434 = vld [vmem:[#allocation7 + $0x70] sm:$0xff]
    %v435 = vld [vmem:[#allocation7 + $0x78] sm:$0xff]
    %v436 = vld [vmem:[#allocation7 + $0x80] sm:$0xff]
    %v437 = vld [vmem:[#allocation7 + $0x88] sm:$0xff]
    %v438 = vld [vmem:[#allocation7 + $0x90] sm:$0xff]
    %v439 = vld [vmem:[#allocation7 + $0x98] sm:$0xff]
    %v440 = vld [vmem:[#allocation7 + $0xa0] sm:$0xff]
    %v441 = vld [vmem:[#allocation7 + $0xa8] sm:$0xff]
    %v442 = vld [vmem:[#allocation7 + $0xb0] sm:$0xff]
    %v443 = vld [vmem:[#allocation7 + $0xb8] sm:$0xff]
    %v444 = vld [vmem:[#allocation7 + $0xc0] sm:$0xff]
    %v445 = vld [vmem:[#allocation7 + $0xc8] sm:$0xff]
    %v446 = vld [vmem:[#allocation7 + $0xd0] sm:$0xff]
    %v447 = vld [vmem:[#allocation7 + $0xd8] sm:$0xff]
    %v448 = vld [vmem:[#allocation7 + $0xe0] sm:$0xff]
    %v449 = vld [vmem:[#allocation7 + $0xe8] sm:$0xff]
    %v450 = vld [vmem:[#allocation7 + $0xf0] sm:$0xff]
    %v451 = vld [vmem:[#allocation7 + $0xf8] sm:$0xff]
    %v452 = vld [vmem:[#allocation3] sm:$0xff]
    %v453 = vld [vmem:[#allocation3 + $0x8] sm:$0xff]
    %v454 = vld [vmem:[#allocation3 + $0x10] sm:$0xff]
    %v455 = vld [vmem:[#allocation3 + $0x18] sm:$0xff]
    %v488 = vunpack.c.l.b16 %v420
    %v489 = vunpack.c.h.b16 %v420
    %v490 = vunpack.c.l.b16 %v421
    %v491 = vunpack.c.h.b16 %v421
    %v492 = vunpack.c.l.b16 %v422
    %v493 = vunpack.c.h.b16 %v422
    %v494 = vunpack.c.l.b16 %v423
    %v495 = vunpack.c.h.b16 %v423
    %v496 = vunpack.c.l.b16 %v424
    %v497 = vunpack.c.h.b16 %v424
    %v498 = vunpack.c.l.b16 %v425
    %v499 = vunpack.c.h.b16 %v425
    %v500 = vunpack.c.l.b16 %v426
    %v501 = vunpack.c.h.b16 %v426
    %v502 = vunpack.c.l.b16 %v427
    %v503 = vunpack.c.h.b16 %v427
    %v504 = vunpack.c.l.b16 %v428
    %v505 = vunpack.c.h.b16 %v428
    %v506 = vunpack.c.l.b16 %v429
    %v507 = vunpack.c.h.b16 %v429
    %v508 = vunpack.c.l.b16 %v430
    %v509 = vunpack.c.h.b16 %v430
    %v510 = vunpack.c.l.b16 %v431
    %v511 = vunpack.c.h.b16 %v431
    %v512 = vunpack.c.l.b16 %v432
    %v513 = vunpack.c.h.b16 %v432
    %v514 = vunpack.c.l.b16 %v433
    %v515 = vunpack.c.h.b16 %v433
    %v516 = vunpack.c.l.b16 %v434
    %v517 = vunpack.c.h.b16 %v434
    %v518 = vunpack.c.l.b16 %v435
    %v519 = vunpack.c.h.b16 %v435
    %v520 = vunpack.c.l.b16 %v436
    %v521 = vunpack.c.h.b16 %v436
    %v522 = vunpack.c.l.b16 %v437
    %v523 = vunpack.c.h.b16 %v437
    %v524 = vunpack.c.l.b16 %v438
    %v525 = vunpack.c.h.b16 %v438
    %v526 = vunpack.c.l.b16 %v439
    %v527 = vunpack.c.h.b16 %v439
    %v528 = vunpack.c.l.b16 %v440
    %v529 = vunpack.c.h.b16 %v440
    %v530 = vunpack.c.l.b16 %v441
    %v531 = vunpack.c.h.b16 %v441
    %v532 = vunpack.c.l.b16 %v442
    %v533 = vunpack.c.h.b16 %v442
    %v534 = vunpack.c.l.b16 %v443
    %v535 = vunpack.c.h.b16 %v443
    %v536 = vunpack.c.l.b16 %v444
    %v537 = vunpack.c.h.b16 %v444
    %v538 = vunpack.c.l.b16 %v445
    %v539 = vunpack.c.h.b16 %v445
    %v540 = vunpack.c.l.b16 %v446
    %v541 = vunpack.c.h.b16 %v446
    %v542 = vunpack.c.l.b16 %v447
    %v543 = vunpack.c.h.b16 %v447
    %v544 = vunpack.c.l.b16 %v448
    %v545 = vunpack.c.h.b16 %v448
    %v546 = vunpack.c.l.b16 %v449
    %v547 = vunpack.c.h.b16 %v449
    %v548 = vunpack.c.l.b16 %v450
    %v549 = vunpack.c.h.b16 %v450
    %v550 = vunpack.c.l.b16 %v451
    %v551 = vunpack.c.h.b16 %v451
    %v552 = vpack.c.b16 %v492, %v488
    %v553 = vpack.c.b16 %v493, %v489
    %v554 = vpack.c.b16 %v494, %v490
    %v555 = vpack.c.b16 %v495, %v491
    %v556 = vpack.c.b16 %v500, %v496
    %v557 = vpack.c.b16 %v501, %v497
    %v558 = vpack.c.b16 %v502, %v498
    %v559 = vpack.c.b16 %v503, %v499
    %v560 = vpack.c.b16 %v508, %v504
    %v561 = vpack.c.b16 %v509, %v505
    %v562 = vpack.c.b16 %v510, %v506
    %v563 = vpack.c.b16 %v511, %v507
    %v564 = vpack.c.b16 %v516, %v512
    %v565 = vpack.c.b16 %v517, %v513
    %v566 = vpack.c.b16 %v518, %v514
    %v567 = vpack.c.b16 %v519, %v515
    %v568 = vpack.c.b16 %v524, %v520
    %v569 = vpack.c.b16 %v525, %v521
    %v570 = vpack.c.b16 %v526, %v522
    %v571 = vpack.c.b16 %v527, %v523
    %v572 = vpack.c.b16 %v532, %v528
    %v573 = vpack.c.b16 %v533, %v529
    %v574 = vpack.c.b16 %v534, %v530
    %v575 = vpack.c.b16 %v535, %v531
    %v576 = vpack.c.b16 %v540, %v536
    %v577 = vpack.c.b16 %v541, %v537
    %v578 = vpack.c.b16 %v542, %v538
    %v579 = vpack.c.b16 %v543, %v539
    %v580 = vpack.c.b16 %v548, %v544
    %v581 = vpack.c.b16 %v549, %v545
    %v582 = vpack.c.b16 %v550, %v546
    %v583 = vpack.c.b16 %v551, %v547
    %616 = vmatprep.subr.bf16.mxu0 %v581
    %617 = vmatpush1.bf16.msra.mxu0 %v580
    %618 = vmatprep.subr.bf16.mxu0 %v577
    %619 = vmatpush1.bf16.msra.mxu0 %v576
    %620 = vmatprep.subr.bf16.mxu0 %v573
    %621 = vmatpush1.bf16.msra.mxu0 %v572
    %622 = vmatprep.subr.bf16.mxu0 %v569
    %623 = vmatpush1.bf16.msra.mxu0 %v568
    %624 = vmatprep.subr.bf16.mxu0 %v565
    %625 = vmatpush1.bf16.msra.mxu0 %v564
    %626 = vmatprep.subr.bf16.mxu0 %v561
    %627 = vmatpush1.bf16.msra.mxu0 %v560
    %628 = vmatprep.subr.bf16.mxu0 %v557
    %629 = vmatpush1.bf16.msra.mxu0 %v556
    %630 = vmatprep.subr.bf16.mxu0 %v553
    %631 = vmatpush1.bf16.msra.mxu0 %v552
    %632 = vmatprep.subr.bf16.mxu0 0
    %633 = vmatpush2.bf16.msra.mxu0 0
    %634 = vmatprep.subr.bf16.mxu0 0
    %635 = vmatpush2.bf16.msra.mxu0 0
    %636 = vmatprep.subr.bf16.mxu0 0
    %637 = vmatpush2.bf16.msra.mxu0 0
    %638 = vmatprep.subr.bf16.mxu0 0
    %639 = vmatpush2.bf16.msra.mxu0 0
    %640 = vmatprep.subr.bf16.mxu0 0
    %641 = vmatpush2.bf16.msra.mxu0 0
    %642 = vmatprep.subr.bf16.mxu0 0
    %643 = vmatpush2.bf16.msra.mxu0 0
    %644 = vmatprep.subr.bf16.mxu0 0
    %645 = vmatpush2.bf16.msra.mxu0 0
    %646 = vmatprep.subr.bf16.mxu0 0
    %647 = vmatpush2.bf16.msra.mxu0 0
    %648 = vmatprep.mubr.bf16.mxu0 0
    %649 = vmatmul.mubr.bf16.gmra.mxu0 0
    %v650 = vpop.f32.mrf.mxu0
    %v651 = vadd.f32 %v452, %v650
    %v652 = vpop.f32.mrf.mxu0
    %v653 = vadd.f32 %v453, %v652
    %v654 = vpop.f32.mrf.mxu0
    %v655 = vpop.f32.mrf.mxu0
    %656 = vdwg.mxu0
    %657 = vmatprep.subr.bf16.mxu0 %v583
    %658 = vmatpush1.bf16.msra.mxu0 %v582
    %659 = vmatprep.subr.bf16.mxu0 %v579
    %660 = vmatpush1.bf16.msra.mxu0 %v578
    %661 = vmatprep.subr.bf16.mxu0 %v575
    %662 = vmatpush1.bf16.msra.mxu0 %v574
    %663 = vmatprep.subr.bf16.mxu0 %v571
    %664 = vmatpush1.bf16.msra.mxu0 %v570
    %665 = vmatprep.subr.bf16.mxu0 %v567
    %666 = vmatpush1.bf16.msra.mxu0 %v566
    %667 = vmatprep.subr.bf16.mxu0 %v563
    %668 = vmatpush1.bf16.msra.mxu0 %v562
    %669 = vmatprep.subr.bf16.mxu0 %v559
    %670 = vmatpush1.bf16.msra.mxu0 %v558
    %671 = vmatprep.subr.bf16.mxu0 %v555
    %672 = vmatpush1.bf16.msra.mxu0 %v554
    %673 = vmatprep.subr.bf16.mxu0 0
    %674 = vmatpush2.bf16.msra.mxu0 0
    %675 = vmatprep.subr.bf16.mxu0 0
    %676 = vmatpush2.bf16.msra.mxu0 0
    %677 = vmatprep.subr.bf16.mxu0 0
    %678 = vmatpush2.bf16.msra.mxu0 0
    %679 = vmatprep.subr.bf16.mxu0 0
    %680 = vmatpush2.bf16.msra.mxu0 0
    %681 = vmatprep.subr.bf16.mxu0 0
    %682 = vmatpush2.bf16.msra.mxu0 0
    %683 = vmatprep.subr.bf16.mxu0 0
    %684 = vmatpush2.bf16.msra.mxu0 0
    %685 = vmatprep.subr.bf16.mxu0 0
    %686 = vmatpush2.bf16.msra.mxu0 0
    %687 = vmatprep.subr.bf16.mxu0 0
    %688 = vmatpush2.bf16.msra.mxu0 0
    %689 = vmatprep.mubr.bf16.mxu0 0
    %690 = vmatmul.mubr.bf16.gmra.mxu0 0
    %v691 = vpop.f32.mrf.mxu0
    %v692 = vadd.f32 %v454, %v691
    %v693 = vpop.f32.mrf.mxu0
    %v694 = vadd.f32 %v455, %v693
    %v695 = vpop.f32.mrf.mxu0
    %v696 = vpop.f32.mrf.mxu0
    %697 = vdwg.mxu0
    %v698 = vmul.f32 %v651, 0.5
    %v699 = vtanh.pop %v698
    %v700 = vmul.f32 %v699, 0.5
    %v701 = vadd.f32 %v700, 0.5
    %v702 = vmul.f32 %v653, 0.5
    %v703 = vtanh.pop %v702
    %v704 = vmul.f32 %v703, 0.5
    %v705 = vadd.f32 %v704, 0.5
    %v706 = vtanh.pop %v692
    %v707 = vmul.f32 %v694, 0.5
    %v708 = vtanh.pop %v707
    %v709 = vmul.f32 %v708, 0.5
    %v710 = vadd.f32 %v709, 0.5
    %v711 = vmul.f32 %v705, 0.0
    %v712 = vmul.f32 %v701, %v706
    %v713 = vadd.f32 %v711, %v712
    %v714 = vtanh.pop %v713
    %v715 = vmul.f32 %v710, %v714
    %v716 = vpack.c.bf16 %v715, %v715
    %v717 = vld [vmem:[#allocation3 + $0x20] sm:$0xff]
    %v718 = vld [vmem:[#allocation3 + $0x28] sm:$0xff]
    %v719 = vld [vmem:[#allocation3 + $0x30] sm:$0xff]
    %v720 = vld [vmem:[#allocation3 + $0x38] sm:$0xff]
    %721 = vmatprep.subr.bf16.mxu0 %v581
    %722 = vmatpush1.bf16.msra.mxu0 %v580
    %723 = vmatprep.subr.bf16.mxu0 %v577
    %724 = vmatpush1.bf16.msra.mxu0 %v576
    %725 = vmatprep.subr.bf16.mxu0 %v573
    %726 = vmatpush1.bf16.msra.mxu0 %v572
    %727 = vmatprep.subr.bf16.mxu0 %v569
    %728 = vmatpush1.bf16.msra.mxu0 %v568
    %729 = vmatprep.subr.bf16.mxu0 %v565
    %730 = vmatpush1.bf16.msra.mxu0 %v564
    %731 = vmatprep.subr.bf16.mxu0 %v561
    %732 = vmatpush1.bf16.msra.mxu0 %v560
    %733 = vmatprep.subr.bf16.mxu0 %v557
    %734 = vmatpush1.bf16.msra.mxu0 %v556
    %735 = vmatprep.subr.bf16.mxu0 %v553
    %736 = vmatpush1.bf16.msra.mxu0 %v552
    %737 = vmatprep.subr.bf16.mxu0 0
    %738 = vmatpush2.bf16.msra.mxu0 0
    %739 = vmatprep.subr.bf16.mxu0 0
    %740 = vmatpush2.bf16.msra.mxu0 0
    %741 = vmatprep.subr.bf16.mxu0 0
    %742 = vmatpush2.bf16.msra.mxu0 0
    %743 = vmatprep.subr.bf16.mxu0 0
    %744 = vmatpush2.bf16.msra.mxu0 0
    %745 = vmatprep.subr.bf16.mxu0 0
    %746 = vmatpush2.bf16.msra.mxu0 0
    %747 = vmatprep.subr.bf16.mxu0 0
    %748 = vmatpush2.bf16.msra.mxu0 0
    %749 = vmatprep.subr.bf16.mxu0 0
    %750 = vmatpush2.bf16.msra.mxu0 0
    %751 = vmatprep.subr.bf16.mxu0 0
    %752 = vmatpush2.bf16.msra.mxu0 0
    %753 = vmatprep.mubr.bf16.mxu0 0
    %754 = vmatmul.mubr.bf16.gmra.mxu0 %v716
    %v755 = vpop.f32.mrf.mxu0
    %v756 = vadd.f32 %v717, %v755
    %v757 = vpop.f32.mrf.mxu0
    %v758 = vadd.f32 %v718, %v757
    %v759 = vpop.f32.mrf.mxu0
    %v760 = vpop.f32.mrf.mxu0
    %761 = vdwg.mxu0
    %762 = vmatprep.subr.bf16.mxu0 %v583
    %763 = vmatpush1.bf16.msra.mxu0 %v582
    %764 = vmatprep.subr.bf16.mxu0 %v579
    %765 = vmatpush1.bf16.msra.mxu0 %v578
    %766 = vmatprep.subr.bf16.mxu0 %v575
    %767 = vmatpush1.bf16.msra.mxu0 %v574
    %768 = vmatprep.subr.bf16.mxu0 %v571
    %769 = vmatpush1.bf16.msra.mxu0 %v570
    %770 = vmatprep.subr.bf16.mxu0 %v567
    %771 = vmatpush1.bf16.msra.mxu0 %v566
    %772 = vmatprep.subr.bf16.mxu0 %v563
    %773 = vmatpush1.bf16.msra.mxu0 %v562
    %774 = vmatprep.subr.bf16.mxu0 %v559
    %775 = vmatpush1.bf16.msra.mxu0 %v558
    %776 = vmatprep.subr.bf16.mxu0 %v555
    %777 = vmatpush1.bf16.msra.mxu0 %v554
    %778 = vmatprep.subr.bf16.mxu0 0
    %779 = vmatpush2.bf16.msra.mxu0 0
    %780 = vmatprep.subr.bf16.mxu0 0
    %781 = vmatpush2.bf16.msra.mxu0 0
    %782 = vmatprep.subr.bf16.mxu0 0
    %783 = vmatpush2.bf16.msra.mxu0 0
    %784 = vmatprep.subr.bf16.mxu0 0
    %785 = vmatpush2.bf16.msra.mxu0 0
    %786 = vmatprep.subr.bf16.mxu0 0
    %787 = vmatpush2.bf16.msra.mxu0 0
    %788 = vmatprep.subr.bf16.mxu0 0
    %789 = vmatpush2.bf16.msra.mxu0 0
    %790 = vmatprep.subr.bf16.mxu0 0
    %791 = vmatpush2.bf16.msra.mxu0 0
    %792 = vmatprep.subr.bf16.mxu0 0
    %793 = vmatpush2.bf16.msra.mxu0 0
    %794 = vmatprep.mubr.bf16.mxu0 0
    %795 = vmatmul.mubr.bf16.gmra.mxu0 %v716
    %v796 = vpop.f32.mrf.mxu0
    %v797 = vadd.f32 %v719, %v796
    %v798 = vpop.f32.mrf.mxu0
    %v799 = vadd.f32 %v720, %v798
    %v800 = vpop.f32.mrf.mxu0
    %v801 = vpop.f32.mrf.mxu0
    %802 = vdwg.mxu0
    %v803 = vmul.f32 %v756, 0.5
    %v804 = vtanh.pop %v803
    %v805 = vmul.f32 %v804, 0.5
    %v806 = vadd.f32 %v805, 0.5
    %v807 = vmul.f32 %v758, 0.5
    %v808 = vtanh.pop %v807
    %v809 = vmul.f32 %v808, 0.5
    %v810 = vadd.f32 %v809, 0.5
    %v811 = vtanh.pop %v797
    %v812 = vmul.f32 %v799, 0.5
    %v813 = vtanh.pop %v812
    %v814 = vmul.f32 %v813, 0.5
    %v815 = vadd.f32 %v814, 0.5
    %v816 = vmul.f32 %v810, %v713
    %v817 = vmul.f32 %v806, %v811
    %v818 = vadd.f32 %v816, %v817
    %v819 = vtanh.pop %v818
    %v820 = vmul.f32 %v815, %v819
    %v821 = vpack.c.bf16 %v820, %v820
    %v822 = vld [vmem:[#allocation3 + $0x40] sm:$0xff]
    %v823 = vld [vmem:[#allocation3 + $0x48] sm:$0xff]
    %v824 = vld [vmem:[#allocation3 + $0x50] sm:$0xff]
    %v825 = vld [vmem:[#allocation3 + $0x58] sm:$0xff]
    %826 = vmatprep.subr.bf16.mxu0 %v581
    %827 = vmatpush1.bf16.msra.mxu0 %v580
    %828 = vmatprep.subr.bf16.mxu0 %v577
    %829 = vmatpush1.bf16.msra.mxu0 %v576
    %830 = vmatprep.subr.bf16.mxu0 %v573
    %831 = vmatpush1.bf16.msra.mxu0 %v572
    %832 = vmatprep.subr.bf16.mxu0 %v569
    %833 = vmatpush1.bf16.msra.mxu0 %v568
    %834 = vmatprep.subr.bf16.mxu0 %v565
    %835 = vmatpush1.bf16.msra.mxu0 %v564
    %836 = vmatprep.subr.bf16.mxu0 %v561
    %837 = vmatpush1.bf16.msra.mxu0 %v560
    %838 = vmatprep.subr.bf16.mxu0 %v557
    %839 = vmatpush1.bf16.msra.mxu0 %v556
    %840 = vmatprep.subr.bf16.mxu0 %v553
    %841 = vmatpush1.bf16.msra.mxu0 %v552
    %842 = vmatprep.subr.bf16.mxu0 0
    %843 = vmatpush2.bf16.msra.mxu0 0
    %844 = vmatprep.subr.bf16.mxu0 0
    %845 = vmatpush2.bf16.msra.mxu0 0
    %846 = vmatprep.subr.bf16.mxu0 0
    %847 = vmatpush2.bf16.msra.mxu0 0
    %848 = vmatprep.subr.bf16.mxu0 0
    %849 = vmatpush2.bf16.msra.mxu0 0
    %850 = vmatprep.subr.bf16.mxu0 0
    %851 = vmatpush2.bf16.msra.mxu0 0
    %852 = vmatprep.subr.bf16.mxu0 0
    %853 = vmatpush2.bf16.msra.mxu0 0
    %854 = vmatprep.subr.bf16.mxu0 0
    %855 = vmatpush2.bf16.msra.mxu0 0
    %856 = vmatprep.subr.bf16.mxu0 0
    %857 = vmatpush2.bf16.msra.mxu0 0
    %858 = vmatprep.mubr.bf16.mxu0 0
    %859 = vmatmul.mubr.bf16.gmra.mxu0 %v821
    %v860 = vpop.f32.mrf.mxu0
    %v861 = vadd.f32 %v822, %v860
    %v862 = vpop.f32.mrf.mxu0
    %v863 = vadd.f32 %v823, %v862
    %v864 = vpop.f32.mrf.mxu0
    %v865 = vpop.f32.mrf.mxu0
    %866 = vdwg.mxu0
    %867 = vmatprep.subr.bf16.mxu0 %v583
    %868 = vmatpush1.bf16.msra.mxu0 %v582
    %869 = vmatprep.subr.bf16.mxu0 %v579
    %870 = vmatpush1.bf16.msra.mxu0 %v578
    %871 = vmatprep.subr.bf16.mxu0 %v575
    %872 = vmatpush1.bf16.msra.mxu0 %v574
    %873 = vmatprep.subr.bf16.mxu0 %v571
    %874 = vmatpush1.bf16.msra.mxu0 %v570
    %875 = vmatprep.subr.bf16.mxu0 %v567
    %876 = vmatpush1.bf16.msra.mxu0 %v566
    %877 = vmatprep.subr.bf16.mxu0 %v563
    %878 = vmatpush1.bf16.msra.mxu0 %v562
    %879 = vmatprep.subr.bf16.mxu0 %v559
    %880 = vmatpush1.bf16.msra.mxu0 %v558
    %881 = vmatprep.subr.bf16.mxu0 %v555
    %882 = vmatpush1.bf16.msra.mxu0 %v554
    %883 = vmatprep.subr.bf16.mxu0 0
    %884 = vmatpush2.bf16.msra.mxu0 0
    %885 = vmatprep.subr.bf16.mxu0 0
    %886 = vmatpush2.bf16.msra.mxu0 0
    %887 = vmatprep.subr.bf16.mxu0 0
    %888 = vmatpush2.bf16.msra.mxu0 0
    %889 = vmatprep.subr.bf16.mxu0 0
    %890 = vmatpush2.bf16.msra.mxu0 0
    %891 = vmatprep.subr.bf16.mxu0 0
    %892 = vmatpush2.bf16.msra.mxu0 0
    %893 = vmatprep.subr.bf16.mxu0 0
    %894 = vmatpush2.bf16.msra.mxu0 0
    %895 = vmatprep.subr.bf16.mxu0 0
    %896 = vmatpush2.bf16.msra.mxu0 0
    %897 = vmatprep.subr.bf16.mxu0 0
    %898 = vmatpush2.bf16.msra.mxu0 0
    %899 = vmatprep.mubr.bf16.mxu0 0
    %900 = vmatmul.mubr.bf16.gmra.mxu0 %v821
    %v901 = vpop.f32.mrf.mxu0
    %v902 = vadd.f32 %v824, %v901
    %v903 = vpop.f32.mrf.mxu0
    %v904 = vadd.f32 %v825, %v903
    %v905 = vpop.f32.mrf.mxu0
    %v906 = vpop.f32.mrf.mxu0
    %907 = vdwg.mxu0
    %v908 = vmul.f32 %v861, 0.5
    %v909 = vtanh.pop %v908
    %v910 = vmul.f32 %v909, 0.5
    %v911 = vadd.f32 %v910, 0.5
    %v912 = vmul.f32 %v863, 0.5
    %v913 = vtanh.pop %v912
    %v914 = vmul.f32 %v913, 0.5
    %v915 = vadd.f32 %v914, 0.5
    %v916 = vtanh.pop %v902
    %v917 = vmul.f32 %v904, 0.5
    %v918 = vtanh.pop %v917
    %v919 = vmul.f32 %v918, 0.5
    %v920 = vadd.f32 %v919, 0.5
    %v921 = vmul.f32 %v915, %v818
    %v922 = vmul.f32 %v911, %v916
    %v923 = vadd.f32 %v921, %v922
    %v924 = vtanh.pop %v923
    %v925 = vmul.f32 %v920, %v924
    %v926 = vpack.c.bf16 %v925, %v925
    %v927 = vld [vmem:[#allocation3 + $0x60] sm:$0xff]
    %v928 = vld [vmem:[#allocation3 + $0x68] sm:$0xff]
    %v929 = vld [vmem:[#allocation3 + $0x70] sm:$0xff]
    %v930 = vld [vmem:[#allocation3 + $0x78] sm:$0xff]
    %931 = vmatprep.subr.bf16.mxu0 %v581
    %932 = vmatpush1.bf16.msra.mxu0 %v580
    %933 = vmatprep.subr.bf16.mxu0 %v577
    %934 = vmatpush1.bf16.msra.mxu0 %v576
    %935 = vmatprep.subr.bf16.mxu0 %v573
    %936 = vmatpush1.bf16.msra.mxu0 %v572
    %937 = vmatprep.subr.bf16.mxu0 %v569
    %938 = vmatpush1.bf16.msra.mxu0 %v568
    %939 = vmatprep.subr.bf16.mxu0 %v565
    %940 = vmatpush1.bf16.msra.mxu0 %v564
    %941 = vmatprep.subr.bf16.mxu0 %v561
    %942 = vmatpush1.bf16.msra.mxu0 %v560
    %943 = vmatprep.subr.bf16.mxu0 %v557
    %944 = vmatpush1.bf16.msra.mxu0 %v556
    %945 = vmatprep.subr.bf16.mxu0 %v553
    %946 = vmatpush1.bf16.msra.mxu0 %v552
    %947 = vmatprep.subr.bf16.mxu0 0
    %948 = vmatpush2.bf16.msra.mxu0 0
    %949 = vmatprep.subr.bf16.mxu0 0
    %950 = vmatpush2.bf16.msra.mxu0 0
    %951 = vmatprep.subr.bf16.mxu0 0
    %952 = vmatpush2.bf16.msra.mxu0 0
    %953 = vmatprep.subr.bf16.mxu0 0
    %954 = vmatpush2.bf16.msra.mxu0 0
    %955 = vmatprep.subr.bf16.mxu0 0
    %956 = vmatpush2.bf16.msra.mxu0 0
    %957 = vmatprep.subr.bf16.mxu0 0
    %958 = vmatpush2.bf16.msra.mxu0 0
    %959 = vmatprep.subr.bf16.mxu0 0
    %960 = vmatpush2.bf16.msra.mxu0 0
    %961 = vmatprep.subr.bf16.mxu0 0
    %962 = vmatpush2.bf16.msra.mxu0 0
    %963 = vmatprep.mubr.bf16.mxu0 0
    %964 = vmatmul.mubr.bf16.gmra.mxu0 %v926
    %v965 = vpop.f32.mrf.mxu0
    %v966 = vadd.f32 %v927, %v965
    %v967 = vpop.f32.mrf.mxu0
    %v968 = vadd.f32 %v928, %v967
    %v969 = vpop.f32.mrf.mxu0
    %v970 = vpop.f32.mrf.mxu0
    %971 = vdwg.mxu0
    %972 = vmatprep.subr.bf16.mxu0 %v583
    %973 = vmatpush1.bf16.msra.mxu0 %v582
    %974 = vmatprep.subr.bf16.mxu0 %v579
    %975 = vmatpush1.bf16.msra.mxu0 %v578
    %976 = vmatprep.subr.bf16.mxu0 %v575
    %977 = vmatpush1.bf16.msra.mxu0 %v574
    %978 = vmatprep.subr.bf16.mxu0 %v571
    %979 = vmatpush1.bf16.msra.mxu0 %v570
    %980 = vmatprep.subr.bf16.mxu0 %v567
    %981 = vmatpush1.bf16.msra.mxu0 %v566
    %982 = vmatprep.subr.bf16.mxu0 %v563
    %983 = vmatpush1.bf16.msra.mxu0 %v562
    %984 = vmatprep.subr.bf16.mxu0 %v559
    %985 = vmatpush1.bf16.msra.mxu0 %v558
    %986 = vmatprep.subr.bf16.mxu0 %v555
    %987 = vmatpush1.bf16.msra.mxu0 %v554
    %988 = vmatprep.subr.bf16.mxu0 0
    %989 = vmatpush2.bf16.msra.mxu0 0
    %990 = vmatprep.subr.bf16.mxu0 0
    %991 = vmatpush2.bf16.msra.mxu0 0
    %992 = vmatprep.subr.bf16.mxu0 0
    %993 = vmatpush2.bf16.msra.mxu0 0
    %994 = vmatprep.subr.bf16.mxu0 0
    %995 = vmatpush2.bf16.msra.mxu0 0
    %996 = vmatprep.subr.bf16.mxu0 0
    %997 = vmatpush2.bf16.msra.mxu0 0
    %998 = vmatprep.subr.bf16.mxu0 0
    %999 = vmatpush2.bf16.msra.mxu0 0
    %1000 = vmatprep.subr.bf16.mxu0 0
    %1001 = vmatpush2.bf16.msra.mxu0 0
    %1002 = vmatprep.subr.bf16.mxu0 0
    %1003 = vmatpush2.bf16.msra.mxu0 0
    %1004 = vmatprep.mubr.bf16.mxu0 0
    %1005 = vmatmul.mubr.bf16.gmra.mxu0 %v926
    %v1006 = vpop.f32.mrf.mxu0
    %v1007 = vadd.f32 %v929, %v1006
    %v1008 = vpop.f32.mrf.mxu0
    %v1009 = vadd.f32 %v930, %v1008
    %v1010 = vpop.f32.mrf.mxu0
    %v1011 = vpop.f32.mrf.mxu0
    %1012 = vdwg.mxu0
    %v1013 = vmul.f32 %v966, 0.5
    %v1014 = vtanh.pop %v1013
    %v1015 = vmul.f32 %v1014, 0.5
    %v1016 = vadd.f32 %v1015, 0.5
    %v1017 = vmul.f32 %v968, 0.5
    %v1018 = vtanh.pop %v1017
    %v1019 = vmul.f32 %v1018, 0.5
    %v1020 = vadd.f32 %v1019, 0.5
    %v1021 = vtanh.pop %v1007
    %v1022 = vmul.f32 %v1009, 0.5
    %v1023 = vtanh.pop %v1022
    %v1024 = vmul.f32 %v1023, 0.5
    %v1025 = vadd.f32 %v1024, 0.5
    %v1026 = vmul.f32 %v1020, %v923
    %v1027 = vmul.f32 %v1016, %v1021
    %v1028 = vadd.f32 %v1026, %v1027
    %v1029 = vtanh.pop %v1028
    %v1030 = vmul.f32 %v1025, %v1029
    %v1031 = vpack.c.bf16 %v1030, %v1030
    %v1032 = vld [vmem:[#allocation3 + $0x80] sm:$0xff]
    %v1033 = vld [vmem:[#allocation3 + $0x88] sm:$0xff]
    %v1034 = vld [vmem:[#allocation3 + $0x90] sm:$0xff]
    %v1035 = vld [vmem:[#allocation3 + $0x98] sm:$0xff]
    %1036 = vmatprep.subr.bf16.mxu0 %v581
    %1037 = vmatpush1.bf16.msra.mxu0 %v580
    %1038 = vmatprep.subr.bf16.mxu0 %v577
    %1039 = vmatpush1.bf16.msra.mxu0 %v576
    %1040 = vmatprep.subr.bf16.mxu0 %v573
    %1041 = vmatpush1.bf16.msra.mxu0 %v572
    %1042 = vmatprep.subr.bf16.mxu0 %v569
    %1043 = vmatpush1.bf16.msra.mxu0 %v568
    %1044 = vmatprep.subr.bf16.mxu0 %v565
    %1045 = vmatpush1.bf16.msra.mxu0 %v564
    %1046 = vmatprep.subr.bf16.mxu0 %v561
    %1047 = vmatpush1.bf16.msra.mxu0 %v560
    %1048 = vmatprep.subr.bf16.mxu0 %v557
    %1049 = vmatpush1.bf16.msra.mxu0 %v556
    %1050 = vmatprep.subr.bf16.mxu0 %v553
    %1051 = vmatpush1.bf16.msra.mxu0 %v552
    %1052 = vmatprep.subr.bf16.mxu0 0
    %1053 = vmatpush2.bf16.msra.mxu0 0
    %1054 = vmatprep.subr.bf16.mxu0 0
    %1055 = vmatpush2.bf16.msra.mxu0 0
    %1056 = vmatprep.subr.bf16.mxu0 0
    %1057 = vmatpush2.bf16.msra.mxu0 0
    %1058 = vmatprep.subr.bf16.mxu0 0
    %1059 = vmatpush2.bf16.msra.mxu0 0
    %1060 = vmatprep.subr.bf16.mxu0 0
    %1061 = vmatpush2.bf16.msra.mxu0 0
    %1062 = vmatprep.subr.bf16.mxu0 0
    %1063 = vmatpush2.bf16.msra.mxu0 0
    %1064 = vmatprep.subr.bf16.mxu0 0
    %1065 = vmatpush2.bf16.msra.mxu0 0
    %1066 = vmatprep.subr.bf16.mxu0 0
    %1067 = vmatpush2.bf16.msra.mxu0 0
    %1068 = vmatprep.mubr.bf16.mxu0 0
    %1069 = vmatmul.mubr.bf16.gmra.mxu0 %v1031
    %v1070 = vpop.f32.mrf.mxu0
    %v1071 = vadd.f32 %v1032, %v1070
    %v1072 = vpop.f32.mrf.mxu0
    %v1073 = vadd.f32 %v1033, %v1072
    %v1074 = vpop.f32.mrf.mxu0
    %v1075 = vpop.f32.mrf.mxu0
    %1076 = vdwg.mxu0
    %1077 = vmatprep.subr.bf16.mxu0 %v583
    %1078 = vmatpush1.bf16.msra.mxu0 %v582
    %1079 = vmatprep.subr.bf16.mxu0 %v579
    %1080 = vmatpush1.bf16.msra.mxu0 %v578
    %1081 = vmatprep.subr.bf16.mxu0 %v575
    %1082 = vmatpush1.bf16.msra.mxu0 %v574
    %1083 = vmatprep.subr.bf16.mxu0 %v571
    %1084 = vmatpush1.bf16.msra.mxu0 %v570
    %1085 = vmatprep.subr.bf16.mxu0 %v567
    %1086 = vmatpush1.bf16.msra.mxu0 %v566
    %1087 = vmatprep.subr.bf16.mxu0 %v563
    %1088 = vmatpush1.bf16.msra.mxu0 %v562
    %1089 = vmatprep.subr.bf16.mxu0 %v559
    %1090 = vmatpush1.bf16.msra.mxu0 %v558
    %1091 = vmatprep.subr.bf16.mxu0 %v555
    %1092 = vmatpush1.bf16.msra.mxu0 %v554
    %1093 = vmatprep.subr.bf16.mxu0 0
    %1094 = vmatpush2.bf16.msra.mxu0 0
    %1095 = vmatprep.subr.bf16.mxu0 0
    %1096 = vmatpush2.bf16.msra.mxu0 0
    %1097 = vmatprep.subr.bf16.mxu0 0
    %1098 = vmatpush2.bf16.msra.mxu0 0
    %1099 = vmatprep.subr.bf16.mxu0 0
    %1100 = vmatpush2.bf16.msra.mxu0 0
    %1101 = vmatprep.subr.bf16.mxu0 0
    %1102 = vmatpush2.bf16.msra.mxu0 0
    %1103 = vmatprep.subr.bf16.mxu0 0
    %1104 = vmatpush2.bf16.msra.mxu0 0
    %1105 = vmatprep.subr.bf16.mxu0 0
    %1106 = vmatpush2.bf16.msra.mxu0 0
    %1107 = vmatprep.subr.bf16.mxu0 0
    %1108 = vmatpush2.bf16.msra.mxu0 0
    %1109 = vmatprep.mubr.bf16.mxu0 0
    %1110 = vmatmul.mubr.bf16.gmra.mxu0 %v1031
    %v1111 = vpop.f32.mrf.mxu0
    %v1112 = vadd.f32 %v1034, %v1111
    %v1113 = vpop.f32.mrf.mxu0
    %v1114 = vadd.f32 %v1035, %v1113
    %v1115 = vpop.f32.mrf.mxu0
    %v1116 = vpop.f32.mrf.mxu0
    %1117 = vdwg.mxu0
    %v1118 = vmul.f32 %v1071, 0.5
    %v1119 = vtanh.pop %v1118
    %v1120 = vmul.f32 %v1119, 0.5
    %v1121 = vadd.f32 %v1120, 0.5
    %v1122 = vmul.f32 %v1073, 0.5
    %v1123 = vtanh.pop %v1122
    %v1124 = vmul.f32 %v1123, 0.5
    %v1125 = vadd.f32 %v1124, 0.5
    %v1126 = vtanh.pop %v1112
    %v1127 = vmul.f32 %v1114, 0.5
    %v1128 = vtanh.pop %v1127
    %v1129 = vmul.f32 %v1128, 0.5
    %v1130 = vadd.f32 %v1129, 0.5
    %v1131 = vmul.f32 %v1125, %v1028
    %v1132 = vmul.f32 %v1121, %v1126
    %v1133 = vadd.f32 %v1131, %v1132
    %v1134 = vtanh.pop %v1133
    %v1135 = vmul.f32 %v1130, %v1134
    %v1136 = vpack.c.bf16 %v1135, %v1135
    %v1137 = vld [vmem:[#allocation3 + $0xa0] sm:$0xff]
    %v1138 = vld [vmem:[#allocation3 + $0xa8] sm:$0xff]
    %v1139 = vld [vmem:[#allocation3 + $0xb0] sm:$0xff]
    %v1140 = vld [vmem:[#allocation3 + $0xb8] sm:$0xff]
    %1141 = vmatprep.subr.bf16.mxu0 %v581
    %1142 = vmatpush1.bf16.msra.mxu0 %v580
    %1143 = vmatprep.subr.bf16.mxu0 %v577
    %1144 = vmatpush1.bf16.msra.mxu0 %v576
    %1145 = vmatprep.subr.bf16.mxu0 %v573
    %1146 = vmatpush1.bf16.msra.mxu0 %v572
    %1147 = vmatprep.subr.bf16.mxu0 %v569
    %1148 = vmatpush1.bf16.msra.mxu0 %v568
    %1149 = vmatprep.subr.bf16.mxu0 %v565
    %1150 = vmatpush1.bf16.msra.mxu0 %v564
    %1151 = vmatprep.subr.bf16.mxu0 %v561
    %1152 = vmatpush1.bf16.msra.mxu0 %v560
    %1153 = vmatprep.subr.bf16.mxu0 %v557
    %1154 = vmatpush1.bf16.msra.mxu0 %v556
    %1155 = vmatprep.subr.bf16.mxu0 %v553
    %1156 = vmatpush1.bf16.msra.mxu0 %v552
    %1157 = vmatprep.subr.bf16.mxu0 0
    %1158 = vmatpush2.bf16.msra.mxu0 0
    %1159 = vmatprep.subr.bf16.mxu0 0
    %1160 = vmatpush2.bf16.msra.mxu0 0
    %1161 = vmatprep.subr.bf16.mxu0 0
    %1162 = vmatpush2.bf16.msra.mxu0 0
    %1163 = vmatprep.subr.bf16.mxu0 0
    %1164 = vmatpush2.bf16.msra.mxu0 0
    %1165 = vmatprep.subr.bf16.mxu0 0
    %1166 = vmatpush2.bf16.msra.mxu0 0
    %1167 = vmatprep.subr.bf16.mxu0 0
    %1168 = vmatpush2.bf16.msra.mxu0 0
    %1169 = vmatprep.subr.bf16.mxu0 0
    %1170 = vmatpush2.bf16.msra.mxu0 0
    %1171 = vmatprep.subr.bf16.mxu0 0
    %1172 = vmatpush2.bf16.msra.mxu0 0
    %1173 = vmatprep.mubr.bf16.mxu0 0
    %1174 = vmatmul.mubr.bf16.gmra.mxu0 %v1136
    %v1175 = vpop.f32.mrf.mxu0
    %v1176 = vadd.f32 %v1137, %v1175
    %v1177 = vpop.f32.mrf.mxu0
    %v1178 = vadd.f32 %v1138, %v1177
    %v1179 = vpop.f32.mrf.mxu0
    %v1180 = vpop.f32.mrf.mxu0
    %1181 = vdwg.mxu0
    %1182 = vmatprep.subr.bf16.mxu0 %v583
    %1183 = vmatpush1.bf16.msra.mxu0 %v582
    %1184 = vmatprep.subr.bf16.mxu0 %v579
    %1185 = vmatpush1.bf16.msra.mxu0 %v578
    %1186 = vmatprep.subr.bf16.mxu0 %v575
    %1187 = vmatpush1.bf16.msra.mxu0 %v574
    %1188 = vmatprep.subr.bf16.mxu0 %v571
    %1189 = vmatpush1.bf16.msra.mxu0 %v570
    %1190 = vmatprep.subr.bf16.mxu0 %v567
    %1191 = vmatpush1.bf16.msra.mxu0 %v566
    %1192 = vmatprep.subr.bf16.mxu0 %v563
    %1193 = vmatpush1.bf16.msra.mxu0 %v562
    %1194 = vmatprep.subr.bf16.mxu0 %v559
    %1195 = vmatpush1.bf16.msra.mxu0 %v558
    %1196 = vmatprep.subr.bf16.mxu0 %v555
    %1197 = vmatpush1.bf16.msra.mxu0 %v554
    %1198 = vmatprep.subr.bf16.mxu0 0
    %1199 = vmatpush2.bf16.msra.mxu0 0
    %1200 = vmatprep.subr.bf16.mxu0 0
    %1201 = vmatpush2.bf16.msra.mxu0 0
    %1202 = vmatprep.subr.bf16.mxu0 0
    %1203 = vmatpush2.bf16.msra.mxu0 0
    %1204 = vmatprep.subr.bf16.mxu0 0
    %1205 = vmatpush2.bf16.msra.mxu0 0
    %1206 = vmatprep.subr.bf16.mxu0 0
    %1207 = vmatpush2.bf16.msra.mxu0 0
    %1208 = vmatprep.subr.bf16.mxu0 0
    %1209 = vmatpush2.bf16.msra.mxu0 0
    %1210 = vmatprep.subr.bf16.mxu0 0
    %1211 = vmatpush2.bf16.msra.mxu0 0
    %1212 = vmatprep.subr.bf16.mxu0 0
    %1213 = vmatpush2.bf16.msra.mxu0 0
    %1214 = vmatprep.mubr.bf16.mxu0 0
    %1215 = vmatmul.mubr.bf16.gmra.mxu0 %v1136
    %v1216 = vpop.f32.mrf.mxu0
    %v1217 = vadd.f32 %v1139, %v1216
    %v1218 = vpop.f32.mrf.mxu0
    %v1219 = vadd.f32 %v1140, %v1218
    %v1220 = vpop.f32.mrf.mxu0
    %v1221 = vpop.f32.mrf.mxu0
    %1222 = vdwg.mxu0
    %v1223 = vmul.f32 %v1176, 0.5
    %v1224 = vtanh.pop %v1223
    %v1225 = vmul.f32 %v1224, 0.5
    %v1226 = vadd.f32 %v1225, 0.5
    %v1227 = vmul.f32 %v1178, 0.5
    %v1228 = vtanh.pop %v1227
    %v1229 = vmul.f32 %v1228, 0.5
    %v1230 = vadd.f32 %v1229, 0.5
    %v1231 = vtanh.pop %v1217
    %v1232 = vmul.f32 %v1219, 0.5
    %v1233 = vtanh.pop %v1232
    %v1234 = vmul.f32 %v1233, 0.5
    %v1235 = vadd.f32 %v1234, 0.5
    %v1236 = vmul.f32 %v1230, %v1133
    %v1237 = vmul.f32 %v1226, %v1231
    %v1238 = vadd.f32 %v1236, %v1237
    %v1239 = vtanh.pop %v1238
    %v1240 = vmul.f32 %v1235, %v1239
    %v1241 = vpack.c.bf16 %v1240, %v1240
    %v1242 = vld [vmem:[#allocation3 + $0xc0] sm:$0xff]
    %v1243 = vld [vmem:[#allocation3 + $0xc8] sm:$0xff]
    %v1244 = vld [vmem:[#allocation3 + $0xd0] sm:$0xff]
    %v1245 = vld [vmem:[#allocation3 + $0xd8] sm:$0xff]
    %1246 = vmatprep.subr.bf16.mxu0 %v581
    %1247 = vmatpush1.bf16.msra.mxu0 %v580
    %1248 = vmatprep.subr.bf16.mxu0 %v577
    %1249 = vmatpush1.bf16.msra.mxu0 %v576
    %1250 = vmatprep.subr.bf16.mxu0 %v573
    %1251 = vmatpush1.bf16.msra.mxu0 %v572
    %1252 = vmatprep.subr.bf16.mxu0 %v569
    %1253 = vmatpush1.bf16.msra.mxu0 %v568
    %1254 = vmatprep.subr.bf16.mxu0 %v565
    %1255 = vmatpush1.bf16.msra.mxu0 %v564
    %1256 = vmatprep.subr.bf16.mxu0 %v561
    %1257 = vmatpush1.bf16.msra.mxu0 %v560
    %1258 = vmatprep.subr.bf16.mxu0 %v557
    %1259 = vmatpush1.bf16.msra.mxu0 %v556
    %1260 = vmatprep.subr.bf16.mxu0 %v553
    %1261 = vmatpush1.bf16.msra.mxu0 %v552
    %1262 = vmatprep.subr.bf16.mxu0 0
    %1263 = vmatpush2.bf16.msra.mxu0 0
    %1264 = vmatprep.subr.bf16.mxu0 0
    %1265 = vmatpush2.bf16.msra.mxu0 0
    %1266 = vmatprep.subr.bf16.mxu0 0
    %1267 = vmatpush2.bf16.msra.mxu0 0
    %1268 = vmatprep.subr.bf16.mxu0 0
    %1269 = vmatpush2.bf16.msra.mxu0 0
    %1270 = vmatprep.subr.bf16.mxu0 0
    %1271 = vmatpush2.bf16.msra.mxu0 0
    %1272 = vmatprep.subr.bf16.mxu0 0
    %1273 = vmatpush2.bf16.msra.mxu0 0
    %1274 = vmatprep.subr.bf16.mxu0 0
    %1275 = vmatpush2.bf16.msra.mxu0 0
    %1276 = vmatprep.subr.bf16.mxu0 0
    %1277 = vmatpush2.bf16.msra.mxu0 0
    %1278 = vmatprep.mubr.bf16.mxu0 0
    %1279 = vmatmul.mubr.bf16.gmra.mxu0 %v1241
    %v1280 = vpop.f32.mrf.mxu0
    %v1281 = vadd.f32 %v1242, %v1280
    %v1282 = vpop.f32.mrf.mxu0
    %v1283 = vadd.f32 %v1243, %v1282
    %v1284 = vpop.f32.mrf.mxu0
    %v1285 = vpop.f32.mrf.mxu0
    %1286 = vdwg.mxu0
    %1287 = vmatprep.subr.bf16.mxu0 %v583
    %1288 = vmatpush1.bf16.msra.mxu0 %v582
    %1289 = vmatprep.subr.bf16.mxu0 %v579
    %1290 = vmatpush1.bf16.msra.mxu0 %v578
    %1291 = vmatprep.subr.bf16.mxu0 %v575
    %1292 = vmatpush1.bf16.msra.mxu0 %v574
    %1293 = vmatprep.subr.bf16.mxu0 %v571
    %1294 = vmatpush1.bf16.msra.mxu0 %v570
    %1295 = vmatprep.subr.bf16.mxu0 %v567
    %1296 = vmatpush1.bf16.msra.mxu0 %v566
    %1297 = vmatprep.subr.bf16.mxu0 %v563
    %1298 = vmatpush1.bf16.msra.mxu0 %v562
    %1299 = vmatprep.subr.bf16.mxu0 %v559
    %1300 = vmatpush1.bf16.msra.mxu0 %v558
    %1301 = vmatprep.subr.bf16.mxu0 %v555
    %1302 = vmatpush1.bf16.msra.mxu0 %v554
    %1303 = vmatprep.subr.bf16.mxu0 0
    %1304 = vmatpush2.bf16.msra.mxu0 0
    %1305 = vmatprep.subr.bf16.mxu0 0
    %1306 = vmatpush2.bf16.msra.mxu0 0
    %1307 = vmatprep.subr.bf16.mxu0 0
    %1308 = vmatpush2.bf16.msra.mxu0 0
    %1309 = vmatprep.subr.bf16.mxu0 0
    %1310 = vmatpush2.bf16.msra.mxu0 0
    %1311 = vmatprep.subr.bf16.mxu0 0
    %1312 = vmatpush2.bf16.msra.mxu0 0
    %1313 = vmatprep.subr.bf16.mxu0 0
    %1314 = vmatpush2.bf16.msra.mxu0 0
    %1315 = vmatprep.subr.bf16.mxu0 0
    %1316 = vmatpush2.bf16.msra.mxu0 0
    %1317 = vmatprep.subr.bf16.mxu0 0
    %1318 = vmatpush2.bf16.msra.mxu0 0
    %1319 = vmatprep.mubr.bf16.mxu0 0
    %1320 = vmatmul.mubr.bf16.gmra.mxu0 %v1241
    %v1321 = vpop.f32.mrf.mxu0
    %v1322 = vadd.f32 %v1244, %v1321
    %v1323 = vpop.f32.mrf.mxu0
    %v1324 = vadd.f32 %v1245, %v1323
    %v1325 = vpop.f32.mrf.mxu0
    %v1326 = vpop.f32.mrf.mxu0
    %1327 = vdwg.mxu0
    %v1328 = vmul.f32 %v1281, 0.5
    %v1329 = vtanh.pop %v1328
    %v1330 = vmul.f32 %v1329, 0.5
    %v1331 = vadd.f32 %v1330, 0.5
    %v1332 = vmul.f32 %v1283, 0.5
    %v1333 = vtanh.pop %v1332
    %v1334 = vmul.f32 %v1333, 0.5
    %v1335 = vadd.f32 %v1334, 0.5
    %v1336 = vtanh.pop %v1322
    %v1337 = vmul.f32 %v1324, 0.5
    %v1338 = vtanh.pop %v1337
    %v1339 = vmul.f32 %v1338, 0.5
    %v1340 = vadd.f32 %v1339, 0.5
    %v1341 = vmul.f32 %v1335, %v1238
    %v1342 = vmul.f32 %v1331, %v1336
    %v1343 = vadd.f32 %v1341, %v1342
    %v1344 = vtanh.pop %v1343
    %v1345 = vmul.f32 %v1340, %v1344
    %v1346 = vpack.c.bf16 %v1345, %v1345
    %v1347 = vld [vmem:[#allocation3 + $0xe0] sm:$0xff]
    %v1348 = vld [vmem:[#allocation3 + $0xe8] sm:$0xff]
    %v1349 = vld [vmem:[#allocation3 + $0xf0] sm:$0xff]
    %v1350 = vld [vmem:[#allocation3 + $0xf8] sm:$0xff]
    %1351 = vmatprep.subr.bf16.mxu0 %v581
    %1352 = vmatpush1.bf16.msra.mxu0 %v580
    %1353 = vmatprep.subr.bf16.mxu0 %v577
    %1354 = vmatpush1.bf16.msra.mxu0 %v576
    %1355 = vmatprep.subr.bf16.mxu0 %v573
    %1356 = vmatpush1.bf16.msra.mxu0 %v572
    %1357 = vmatprep.subr.bf16.mxu0 %v569
    %1358 = vmatpush1.bf16.msra.mxu0 %v568
    %1359 = vmatprep.subr.bf16.mxu0 %v565
    %1360 = vmatpush1.bf16.msra.mxu0 %v564
    %1361 = vmatprep.subr.bf16.mxu0 %v561
    %1362 = vmatpush1.bf16.msra.mxu0 %v560
    %1363 = vmatprep.subr.bf16.mxu0 %v557
    %1364 = vmatpush1.bf16.msra.mxu0 %v556
    %1365 = vmatprep.subr.bf16.mxu0 %v553
    %1366 = vmatpush1.bf16.msra.mxu0 %v552
    %1367 = vmatprep.subr.bf16.mxu0 0
    %1368 = vmatpush2.bf16.msra.mxu0 0
    %1369 = vmatprep.subr.bf16.mxu0 0
    %1370 = vmatpush2.bf16.msra.mxu0 0
    %1371 = vmatprep.subr.bf16.mxu0 0
    %1372 = vmatpush2.bf16.msra.mxu0 0
    %1373 = vmatprep.subr.bf16.mxu0 0
    %1374 = vmatpush2.bf16.msra.mxu0 0
    %1375 = vmatprep.subr.bf16.mxu0 0
    %1376 = vmatpush2.bf16.msra.mxu0 0
    %1377 = vmatprep.subr.bf16.mxu0 0
    %1378 = vmatpush2.bf16.msra.mxu0 0
    %1379 = vmatprep.subr.bf16.mxu0 0
    %1380 = vmatpush2.bf16.msra.mxu0 0
    %1381 = vmatprep.subr.bf16.mxu0 0
    %1382 = vmatpush2.bf16.msra.mxu0 0
    %1383 = vmatprep.mubr.bf16.mxu0 0
    %1384 = vmatmul.mubr.bf16.gmra.mxu0 %v1346
    %v1385 = vpop.f32.mrf.mxu0
    %v1386 = vadd.f32 %v1347, %v1385
    %v1387 = vpop.f32.mrf.mxu0
    %v1388 = vadd.f32 %v1348, %v1387
    %v1389 = vpop.f32.mrf.mxu0
    %v1390 = vpop.f32.mrf.mxu0
    %1391 = vdwg.mxu0
    %1392 = vmatprep.subr.bf16.mxu0 %v583
    %1393 = vmatpush1.bf16.msra.mxu0 %v582
    %1394 = vmatprep.subr.bf16.mxu0 %v579
    %1395 = vmatpush1.bf16.msra.mxu0 %v578
    %1396 = vmatprep.subr.bf16.mxu0 %v575
    %1397 = vmatpush1.bf16.msra.mxu0 %v574
    %1398 = vmatprep.subr.bf16.mxu0 %v571
    %1399 = vmatpush1.bf16.msra.mxu0 %v570
    %1400 = vmatprep.subr.bf16.mxu0 %v567
    %1401 = vmatpush1.bf16.msra.mxu0 %v566
    %1402 = vmatprep.subr.bf16.mxu0 %v563
    %1403 = vmatpush1.bf16.msra.mxu0 %v562
    %1404 = vmatprep.subr.bf16.mxu0 %v559
    %1405 = vmatpush1.bf16.msra.mxu0 %v558
    %1406 = vmatprep.subr.bf16.mxu0 %v555
    %1407 = vmatpush1.bf16.msra.mxu0 %v554
    %1408 = vmatprep.subr.bf16.mxu0 0
    %1409 = vmatpush2.bf16.msra.mxu0 0
    %1410 = vmatprep.subr.bf16.mxu0 0
    %1411 = vmatpush2.bf16.msra.mxu0 0
    %1412 = vmatprep.subr.bf16.mxu0 0
    %1413 = vmatpush2.bf16.msra.mxu0 0
    %1414 = vmatprep.subr.bf16.mxu0 0
    %1415 = vmatpush2.bf16.msra.mxu0 0
    %1416 = vmatprep.subr.bf16.mxu0 0
    %1417 = vmatpush2.bf16.msra.mxu0 0
    %1418 = vmatprep.subr.bf16.mxu0 0
    %1419 = vmatpush2.bf16.msra.mxu0 0
    %1420 = vmatprep.subr.bf16.mxu0 0
    %1421 = vmatpush2.bf16.msra.mxu0 0
    %1422 = vmatprep.subr.bf16.mxu0 0
    %1423 = vmatpush2.bf16.msra.mxu0 0
    %1424 = vmatprep.mubr.bf16.mxu0 0
    %1425 = vmatmul.mubr.bf16.gmra.mxu0 %v1346
    %v1426 = vpop.f32.mrf.mxu0
    %v1427 = vadd.f32 %v1349, %v1426
    %v1428 = vpop.f32.mrf.mxu0
    %v1429 = vadd.f32 %v1350, %v1428
    %v1430 = vpop.f32.mrf.mxu0
    %v1431 = vpop.f32.mrf.mxu0
    %1432 = vdwg.mxu0
    %v1433 = vmul.f32 %v1386, 0.5
    %v1434 = vtanh.pop %v1433
    %v1435 = vmul.f32 %v1434, 0.5
    %v1436 = vadd.f32 %v1435, 0.5
    %v1437 = vmul.f32 %v1388, 0.5
    %v1438 = vtanh.pop %v1437
    %v1439 = vmul.f32 %v1438, 0.5
    %v1440 = vadd.f32 %v1439, 0.5
    %v1441 = vtanh.pop %v1427
    %v1442 = vmul.f32 %v1429, 0.5
    %v1443 = vtanh.pop %v1442
    %v1444 = vmul.f32 %v1443, 0.5
    %v1445 = vadd.f32 %v1444, 0.5
    %v1446 = vmul.f32 %v1440, %v1343
    %v1447 = vmul.f32 %v1436, %v1441
    %v1448 = vadd.f32 %v1446, %v1447
    %v1449 = vtanh.pop %v1448
    %v1450 = vmul.f32 %v1445, %v1449
    %v1451 = vpack.c.bf16 %v1450, %v1450
    %v1452 = vld [vmem:[%s5] sm:$0xf]
    %v1453 = vld [vmem:[%s5 + $0x4] sm:$0xf]
    %v1454 = vld [vmem:[%s5 + $0x8] sm:$0xf]
    %v1455 = vld [vmem:[%s5 + $0xc] sm:$0xf]
    %v1456 = vld [vmem:[%s5 + $0x10] sm:$0xf]
    %v1457 = vld [vmem:[%s5 + $0x14] sm:$0xf]
    %v1458 = vld [vmem:[%s5 + $0x18] sm:$0xf]
    %v1459 = vld [vmem:[%s5 + $0x1c] sm:$0xf]
    %v1460 = vld [vmem:[%s5 + $0x20] sm:$0xf]
    %v1461 = vld [vmem:[%s5 + $0x24] sm:$0xf]
    %v1462 = vld [vmem:[%s5 + $0x28] sm:$0xf]
    %v1463 = vld [vmem:[%s5 + $0x2c] sm:$0xf]
    %v1464 = vld [vmem:[%s5 + $0x30] sm:$0xf]
    %v1465 = vld [vmem:[%s5 + $0x34] sm:$0xf]
    %v1466 = vld [vmem:[%s5 + $0x38] sm:$0xf]
    %v1467 = vld [vmem:[%s5 + $0x3c] sm:$0xf]
    %v1468 = vld [vmem:[%s6] sm:$0x1]
    %v1470 = vlaneseq
    %v1471 = vshrl.u32 %v1470, 7
    %v1472 = vsub.s32 0, %v1471
    %v1473 = vrot.slane %v1468, %v1472
    %v1491 = vunpack.c.l.b16 %v1452
    %v1492 = vunpack.c.l.b16 %v1453
    %v1493 = vunpack.c.l.b16 %v1454
    %v1494 = vunpack.c.l.b16 %v1455
    %v1495 = vunpack.c.l.b16 %v1456
    %v1496 = vunpack.c.l.b16 %v1457
    %v1497 = vunpack.c.l.b16 %v1458
    %v1498 = vunpack.c.l.b16 %v1459
    %v1499 = vunpack.c.l.b16 %v1460
    %v1500 = vunpack.c.l.b16 %v1461
    %v1501 = vunpack.c.l.b16 %v1462
    %v1502 = vunpack.c.l.b16 %v1463
    %v1503 = vunpack.c.l.b16 %v1464
    %v1504 = vunpack.c.l.b16 %v1465
    %v1505 = vunpack.c.l.b16 %v1466
    %v1506 = vunpack.c.l.b16 %v1467
    %v1507 = vpack.c.b16 %v1492, %v1491
    %v1508 = vpack.c.b16 %v1494, %v1493
    %v1509 = vpack.c.b16 %v1496, %v1495
    %v1510 = vpack.c.b16 %v1498, %v1497
    %v1511 = vpack.c.b16 %v1500, %v1499
    %v1512 = vpack.c.b16 %v1502, %v1501
    %v1513 = vpack.c.b16 %v1504, %v1503
    %v1514 = vpack.c.b16 %v1506, %v1505
    %1523 = vmatprep.subr.bf16.mxu0 0
    %1524 = vmatpush1.bf16.msra.mxu0 %v1514
    %1525 = vmatprep.subr.bf16.mxu0 0
    %1526 = vmatpush1.bf16.msra.mxu0 %v1513
    %1527 = vmatprep.subr.bf16.mxu0 0
    %1528 = vmatpush1.bf16.msra.mxu0 %v1512
    %1529 = vmatprep.subr.bf16.mxu0 0
    %1530 = vmatpush1.bf16.msra.mxu0 %v1511
    %1531 = vmatprep.subr.bf16.mxu0 0
    %1532 = vmatpush1.bf16.msra.mxu0 %v1510
    %1533 = vmatprep.subr.bf16.mxu0 0
    %1534 = vmatpush1.bf16.msra.mxu0 %v1509
    %1535 = vmatprep.subr.bf16.mxu0 0
    %1536 = vmatpush1.bf16.msra.mxu0 %v1508
    %1537 = vmatprep.subr.bf16.mxu0 0
    %1538 = vmatpush1.bf16.msra.mxu0 %v1507
    %1539 = vmatprep.subr.bf16.mxu0 0
    %1540 = vmatpush2.bf16.msra.mxu0 0
    %1541 = vmatprep.subr.bf16.mxu0 0
    %1542 = vmatpush2.bf16.msra.mxu0 0
    %1543 = vmatprep.subr.bf16.mxu0 0
    %1544 = vmatpush2.bf16.msra.mxu0 0
    %1545 = vmatprep.subr.bf16.mxu0 0
    %1546 = vmatpush2.bf16.msra.mxu0 0
    %1547 = vmatprep.subr.bf16.mxu0 0
    %1548 = vmatpush2.bf16.msra.mxu0 0
    %1549 = vmatprep.subr.bf16.mxu0 0
    %1550 = vmatpush2.bf16.msra.mxu0 0
    %1551 = vmatprep.subr.bf16.mxu0 0
    %1552 = vmatpush2.bf16.msra.mxu0 0
    %1553 = vmatprep.subr.bf16.mxu0 0
    %1554 = vmatpush2.bf16.msra.mxu0 0
    %1555 = vmatprep.mubr.bf16.mxu0 0
    %1556 = vmatmul.mubr.bf16.gmra.mxu0 %v1451
    %v1557 = vpop.f32.mrf.mxu0
    %v1558 = vadd.f32 %v1473, %v1557
    %v1559 = vpop.f32.mrf.mxu0
    %v1560 = vpop.f32.mrf.mxu0
    %v1561 = vpop.f32.mrf.mxu0
    %1562 = vdwg.mxu0
    %v1563 = vtanh.pop %v1558
    %v1564 = vpack.c.bf16 %v1563, %v1563
    %v1565 = vld [vmem:[#allocation8] sm:$0xf]
    %v1566 = vld [vmem:[#allocation8 + $0x4] sm:$0xf]
    %v1567 = vld [vmem:[#allocation8 + $0x8] sm:$0xf]
    %v1568 = vld [vmem:[#allocation8 + $0xc] sm:$0xf]
    %v1569 = vld [vmem:[#allocation8 + $0x10] sm:$0xf]
    %v1570 = vld [vmem:[#allocation8 + $0x14] sm:$0xf]
    %v1571 = vld [vmem:[#allocation8 + $0x18] sm:$0xf]
    %v1572 = vld [vmem:[#allocation8 + $0x1c] sm:$0xf]
    %v1573 = vld [vmem:[#allocation8 + $0x20] sm:$0xf]
    %v1574 = vld [vmem:[#allocation8 + $0x24] sm:$0xf]
    %v1575 = vld [vmem:[#allocation8 + $0x28] sm:$0xf]
    %v1576 = vld [vmem:[#allocation8 + $0x2c] sm:$0xf]
    %v1577 = vld [vmem:[#allocation8 + $0x30] sm:$0xf]
    %v1578 = vld [vmem:[#allocation8 + $0x34] sm:$0xf]
    %v1579 = vld [vmem:[#allocation8 + $0x38] sm:$0xf]
    %v1580 = vld [vmem:[#allocation8 + $0x3c] sm:$0xf]
    %v1581 = vld [vmem:[%s8] sm:$0x1]
    %v1583 = vlaneseq
    %v1584 = vshrl.u32 %v1583, 7
    %v1585 = vsub.s32 0, %v1584
    %v1586 = vrot.slane %v1581, %v1585
    %v1604 = vunpack.c.l.b16 %v1565
    %v1605 = vunpack.c.l.b16 %v1566
    %v1606 = vunpack.c.l.b16 %v1567
    %v1607 = vunpack.c.l.b16 %v1568
    %v1608 = vunpack.c.l.b16 %v1569
    %v1609 = vunpack.c.l.b16 %v1570
    %v1610 = vunpack.c.l.b16 %v1571
    %v1611 = vunpack.c.l.b16 %v1572
    %v1612 = vunpack.c.l.b16 %v1573
    %v1613 = vunpack.c.l.b16 %v1574
    %v1614 = vunpack.c.l.b16 %v1575
    %v1615 = vunpack.c.l.b16 %v1576
    %v1616 = vunpack.c.l.b16 %v1577
    %v1617 = vunpack.c.l.b16 %v1578
    %v1618 = vunpack.c.l.b16 %v1579
    %v1619 = vunpack.c.l.b16 %v1580
    %v1620 = vpack.c.b16 %v1605, %v1604
    %v1621 = vpack.c.b16 %v1607, %v1606
    %v1622 = vpack.c.b16 %v1609, %v1608
    %v1623 = vpack.c.b16 %v1611, %v1610
    %v1624 = vpack.c.b16 %v1613, %v1612
    %v1625 = vpack.c.b16 %v1615, %v1614
    %v1626 = vpack.c.b16 %v1617, %v1616
    %v1627 = vpack.c.b16 %v1619, %v1618
    %1636 = vmatprep.subr.bf16.mxu0 0
    %1637 = vmatpush1.bf16.msra.mxu0 %v1627
    %1638 = vmatprep.subr.bf16.mxu0 0
    %1639 = vmatpush1.bf16.msra.mxu0 %v1626
    %1640 = vmatprep.subr.bf16.mxu0 0
    %1641 = vmatpush1.bf16.msra.mxu0 %v1625
    %1642 = vmatprep.subr.bf16.mxu0 0
    %1643 = vmatpush1.bf16.msra.mxu0 %v1624
    %1644 = vmatprep.subr.bf16.mxu0 0
    %1645 = vmatpush1.bf16.msra.mxu0 %v1623
    %1646 = vmatprep.subr.bf16.mxu0 0
    %1647 = vmatpush1.bf16.msra.mxu0 %v1622
    %1648 = vmatprep.subr.bf16.mxu0 0
    %1649 = vmatpush1.bf16.msra.mxu0 %v1621
    %1650 = vmatprep.subr.bf16.mxu0 0
    %1651 = vmatpush1.bf16.msra.mxu0 %v1620
    %1652 = vmatprep.subr.bf16.mxu0 0
    %1653 = vmatpush2.bf16.msra.mxu0 0
    %1654 = vmatprep.subr.bf16.mxu0 0
    %1655 = vmatpush2.bf16.msra.mxu0 0
    %1656 = vmatprep.subr.bf16.mxu0 0
    %1657 = vmatpush2.bf16.msra.mxu0 0
    %1658 = vmatprep.subr.bf16.mxu0 0
    %1659 = vmatpush2.bf16.msra.mxu0 0
    %1660 = vmatprep.subr.bf16.mxu0 0
    %1661 = vmatpush2.bf16.msra.mxu0 0
    %1662 = vmatprep.subr.bf16.mxu0 0
    %1663 = vmatpush2.bf16.msra.mxu0 0
    %1664 = vmatprep.subr.bf16.mxu0 0
    %1665 = vmatpush2.bf16.msra.mxu0 0
    %1666 = vmatprep.subr.bf16.mxu0 0
    %1667 = vmatpush2.bf16.msra.mxu0 0
    %1668 = vmatprep.mubr.bf16.mxu0 0
    %1669 = vmatmul.mubr.bf16.gmra.mxu0 %v1564
    %v1670 = vpop.f32.mrf.mxu0
    %v1671 = vadd.f32 %v1586, %v1670
    %v1672 = vpop.f32.mrf.mxu0
    %v1673 = vpop.f32.mrf.mxu0
    %v1674 = vpop.f32.mrf.mxu0
    %1675 = vdwg.mxu0
    %1676 = vst [vmem:[%s9] sm:$0xff] %v1671
    // Predicated region
    $region50: #{rnn_forward.1} parent=1 // pred_check
      _
    $region51: #{rnn_forward.1} parent=1 // pred_check_branch
      %1678 = sbr.rel (0) target = $region53
    $region52: #{rnn_forward.1} parent=1 // pred_region
      _
    $region53: #{rnn_forward.1} parent=1 // pred_fallthru
      _
    // Predicated region
    $region54: #{rnn_forward.1} parent=1 // pred_check
      _
    $region55: #{rnn_forward.1} parent=1 // pred_check_branch
      %1680 = sbr.rel (0) target = $region57
    $region56: #{rnn_forward.1} parent=1 // pred_region
      _
    $region57: #{rnn_forward.1} parent=1 // pred_fallthru
      _
    %1681 = vsyncpa [#allocation5], 1
    %1682 = vsyncpa [#allocation9], 1
    %1683 = vsyncpa [#allocation6], 1

</llo_original>
